<compile_context>
chip_gen: v6e
topology: v6e:2x2x1
jax: 0.10.0
libtpu: 0.0.40
codegen_flags: <defaults>
</compile_context>

<pallas_src>
import functools

import jax
import jax.numpy as jnp
import numpy as np
from jax.experimental import pallas as pl
from jax.experimental.pallas import tpu as pltpu

# Synthetic Config values (deterministic, small):
NUM_KEYPOINTS = 8   # Config.get('num_keypoints')  -> num_capsules == num_route_nodes
L_VEC = 32          # Config.get('capsule', 'l_vec') -> in_channels
OUT_CHANNELS = 1
# TODO(synk): CapsuleNet passes num_iterations=None to CapsuleLayer (would crash in
# PyTorch); we use the standard 3 dynamic-routing iterations (intentional deviation).
NUM_ITERATIONS = 3


def _capsule_routing_kernel(x_ref, w_ref, out_ref, *, num_iterations):
    """Single invocation: dynamic routing for ALL capsules, fully resident in VMEM."""
    x = x_ref[...]            # (B, NR, D)  f32
    w = w_ref[...]            # (NC, NR, D) f32   -- route weights, O == 1 squeezed

    # priors[c, b, r] = sum_d x[b, r, d] * W[c, r, d, 0]
    # Elementwise mul + last-axis reduce keeps this on the VPU/XLU (MXU would be idle
    # at D=32, NR=8).
    priors = jnp.sum(x[None, :, :, :] * w[:, None, :, :], axis=-1)    # (NC, B, NR)

    logits = jnp.zeros_like(priors)                                   # (NC, B, NR)
    v = jnp.zeros(priors.shape[:2] + (1,), jnp.float32)               # (NC, B, 1)

    # Statically unrolled (3 iters) -- keep fully visible to the LLO scheduler.
    for i in range(num_iterations):
        # softmax over the route-node axis (dim=2 of the 5-D torch tensor)
        m = jnp.max(logits, axis=-1, keepdims=True)
        e = jnp.exp(logits - m)
        probs = e / jnp.sum(e, axis=-1, keepdims=True)                # (NC, B, NR)

        # weighted sum over route nodes, then squash over the (size-1) out dim
        s = jnp.sum(probs * priors, axis=-1, keepdims=True)           # (NC, B, 1)
        sq = s * s                                                    # squared_norm (O == 1)
        # squash: (sq/(1+sq)) * s / sqrt(sq)  ==  s*|s|/(1+sq)  when O == 1
        v = s * jnp.abs(s) / (1.0 + sq)                               # (NC, B, 1)

        if i != num_iterations - 1:
            # delta_logits = (priors * outputs).sum(dim=-1, keepdim=True); O == 1
            logits = logits + priors * v

    out_ref[...] = v[:, :, 0]                                         # (NC, B) lane-dense slab


def capsule_net_forward(x, route_weights, num_iterations=NUM_ITERATIONS):
    """x: (B, NR, D) f32; route_weights: (NC, NR, D, 1) f32 -> (NC, B, 1, 1, 1) f32."""
    B, NR, D = x.shape
    NC = route_weights.shape[0]
    w = route_weights[..., 0]                                         # (NC, NR, D)

    kernel = functools.partial(_capsule_routing_kernel, num_iterations=num_iterations)
    out = pl.pallas_call(
        kernel,
        # No grid: whole problem (~10 KB) fits in VMEM; one DMA per operand, one store.
        in_specs=[
            pl.BlockSpec(memory_space=pltpu.MemorySpace.VMEM),        # x, whole array
            pl.BlockSpec(memory_space=pltpu.MemorySpace.VMEM),        # all route weights
        ],
        out_specs=pl.BlockSpec(memory_space=pltpu.MemorySpace.VMEM),
        out_shape=jax.ShapeDtypeStruct((NC, B), jnp.float32),
    )(x, w)
    return out.reshape(NC, B, 1, 1, 1)


def _reference(x, W, num_iterations=NUM_ITERATIONS):
    """Pure-JAX transcription of the PyTorch forward (for validation)."""
    priors = jnp.matmul(x[None, :, :, None, :], W[:, None, :, :, :])  # (NC,B,NR,1,O)
    logits = jnp.zeros_like(priors)
    outputs = None
    for i in range(num_iterations):
        probs = jax.nn.softmax(logits, axis=2)
        s = jnp.sum(probs * priors, axis=2, keepdims=True)
        sq = jnp.sum(s * s, axis=-1, keepdims=True)
        outputs = (sq / (1.0 + sq)) * s / jnp.sqrt(sq)
        if i != num_iterations - 1:
            logits = logits + jnp.sum(priors * outputs, axis=-1, keepdims=True)
    return outputs                                                     # (NC,B,1,1,O)


if __name__ == "__main__":
    B = 2
    key = jax.random.PRNGKey(0)
    k_x, k_w = jax.random.split(key)
    # Input to CapsuleNet: one l_vec-dim pose vector per route node (keypoint).
    x = jax.random.normal(k_x, (B, NUM_KEYPOINTS, L_VEC), jnp.float32)
    # route_weights ~ torch.randn(num_capsules, num_route_nodes, in_channels, out_channels)
    route_weights = jax.random.normal(
        k_w, (NUM_KEYPOINTS, NUM_KEYPOINTS, L_VEC, OUT_CHANNELS), jnp.float32)

    out = jax.block_until_ready(capsule_net_forward(x, route_weights))
    ref = jax.block_until_ready(_reference(x, route_weights))

    assert out.shape == (NUM_KEYPOINTS, B, 1, 1, 1)
    np.testing.assert_allclose(np.asarray(out), np.asarray(ref), rtol=1e-5, atol=1e-5)
    print("KERNEL_OK")
</pallas_src>

<mosaic_0001>
module attributes {stable_mosaic.version = 11 : i64} {
  func.func @_capsule_routing_kernel(%arg0: memref<2x8x32xf32, #tpu.memory_space<vmem>>, %arg1: memref<8x8x32xf32, #tpu.memory_space<vmem>>, %arg2: memref<8x2xf32, #tpu.memory_space<vmem>>) attributes {dimension_semantics = [], scalar_prefetch = 0 : i64, scratch_operands = 0 : i64, tpu.core_type = #tpu.core_type<tc>} {
    %c0 = arith.constant 0 : index
    %c0_0 = arith.constant 0 : index
    %c0_1 = arith.constant 0 : index
    %0 = vector.load %arg0[%c0, %c0_0, %c0_1] : memref<2x8x32xf32, #tpu.memory_space<vmem>>, vector<2x8x32xf32>
    %c0_2 = arith.constant 0 : index
    %c0_3 = arith.constant 0 : index
    %c0_4 = arith.constant 0 : index
    %1 = vector.load %arg1[%c0_2, %c0_3, %c0_4] : memref<8x8x32xf32, #tpu.memory_space<vmem>>, vector<8x8x32xf32>
    %2 = vector.shape_cast %0 : vector<2x8x32xf32> to vector<1x2x8x32xf32>
    %3 = vector.shape_cast %1 : vector<8x8x32xf32> to vector<8x1x8x32xf32>
    %4 = vector.broadcast %2 : vector<1x2x8x32xf32> to vector<8x2x8x32xf32>
    %5 = vector.broadcast %3 : vector<8x1x8x32xf32> to vector<8x2x8x32xf32>
    %6 = arith.mulf %4, %5 : vector<8x2x8x32xf32>
    %cst = arith.constant dense<0.000000e+00> : vector<8x2x8xf32>
    %7 = vector.multi_reduction <add>, %6, %cst [3] : vector<8x2x8x32xf32> to vector<8x2x8xf32>
    %cst_5 = arith.constant 0.000000e+00 : f32
    %8 = vector.broadcast %cst_5 : f32 to vector<8x2x8xf32>
    %cst_6 = arith.constant dense<0xFF800000> : vector<8x2xf32>
    %9 = vector.multi_reduction <maximumf>, %8, %cst_6 [2] : vector<8x2x8xf32> to vector<8x2xf32>
    %10 = vector.shape_cast %9 : vector<8x2xf32> to vector<8x2x1xf32>
    %11 = vector.broadcast %10 : vector<8x2x1xf32> to vector<8x2x8xf32>
    %12 = arith.subf %8, %11 : vector<8x2x8xf32>
    %13 = math.exp %12 : vector<8x2x8xf32>
    %cst_7 = arith.constant dense<0.000000e+00> : vector<8x2xf32>
    %14 = vector.multi_reduction <add>, %13, %cst_7 [2] : vector<8x2x8xf32> to vector<8x2xf32>
    %15 = vector.shape_cast %14 : vector<8x2xf32> to vector<8x2x1xf32>
    %16 = vector.broadcast %15 : vector<8x2x1xf32> to vector<8x2x8xf32>
    %17 = arith.divf %13, %16 : vector<8x2x8xf32>
    %18 = arith.mulf %17, %7 : vector<8x2x8xf32>
    %cst_8 = arith.constant dense<0.000000e+00> : vector<8x2xf32>
    %19 = vector.multi_reduction <add>, %18, %cst_8 [2] : vector<8x2x8xf32> to vector<8x2xf32>
    %20 = vector.shape_cast %19 : vector<8x2xf32> to vector<8x2x1xf32>
    %21 = arith.mulf %20, %20 : vector<8x2x1xf32>
    %22 = math.absf %20 : vector<8x2x1xf32>
    %23 = arith.mulf %20, %22 : vector<8x2x1xf32>
    %cst_9 = arith.constant 1.000000e+00 : f32
    %24 = vector.broadcast %cst_9 : f32 to vector<8x2x1xf32>
    %25 = arith.addf %24, %21 : vector<8x2x1xf32>
    %26 = arith.divf %23, %25 : vector<8x2x1xf32>
    %27 = vector.broadcast %26 : vector<8x2x1xf32> to vector<8x2x8xf32>
    %28 = arith.mulf %7, %27 : vector<8x2x8xf32>
    %29 = arith.addf %8, %28 : vector<8x2x8xf32>
    %cst_10 = arith.constant dense<0xFF800000> : vector<8x2xf32>
    %30 = vector.multi_reduction <maximumf>, %29, %cst_10 [2] : vector<8x2x8xf32> to vector<8x2xf32>
    %31 = vector.shape_cast %30 : vector<8x2xf32> to vector<8x2x1xf32>
    %32 = vector.broadcast %31 : vector<8x2x1xf32> to vector<8x2x8xf32>
    %33 = arith.subf %29, %32 : vector<8x2x8xf32>
    %34 = math.exp %33 : vector<8x2x8xf32>
    %cst_11 = arith.constant dense<0.000000e+00> : vector<8x2xf32>
    %35 = vector.multi_reduction <add>, %34, %cst_11 [2] : vector<8x2x8xf32> to vector<8x2xf32>
    %36 = vector.shape_cast %35 : vector<8x2xf32> to vector<8x2x1xf32>
    %37 = vector.broadcast %36 : vector<8x2x1xf32> to vector<8x2x8xf32>
    %38 = arith.divf %34, %37 : vector<8x2x8xf32>
    %39 = arith.mulf %38, %7 : vector<8x2x8xf32>
    %cst_12 = arith.constant dense<0.000000e+00> : vector<8x2xf32>
    %40 = vector.multi_reduction <add>, %39, %cst_12 [2] : vector<8x2x8xf32> to vector<8x2xf32>
    %41 = vector.shape_cast %40 : vector<8x2xf32> to vector<8x2x1xf32>
    %42 = arith.mulf %41, %41 : vector<8x2x1xf32>
    %43 = math.absf %41 : vector<8x2x1xf32>
    %44 = arith.mulf %41, %43 : vector<8x2x1xf32>
    %cst_13 = arith.constant 1.000000e+00 : f32
    %45 = vector.broadcast %cst_13 : f32 to vector<8x2x1xf32>
    %46 = arith.addf %45, %42 : vector<8x2x1xf32>
    %47 = arith.divf %44, %46 : vector<8x2x1xf32>
    %48 = vector.broadcast %47 : vector<8x2x1xf32> to vector<8x2x8xf32>
    %49 = arith.mulf %7, %48 : vector<8x2x8xf32>
    %50 = arith.addf %29, %49 : vector<8x2x8xf32>
    %cst_14 = arith.constant dense<0xFF800000> : vector<8x2xf32>
    %51 = vector.multi_reduction <maximumf>, %50, %cst_14 [2] : vector<8x2x8xf32> to vector<8x2xf32>
    %52 = vector.shape_cast %51 : vector<8x2xf32> to vector<8x2x1xf32>
    %53 = vector.broadcast %52 : vector<8x2x1xf32> to vector<8x2x8xf32>
    %54 = arith.subf %50, %53 : vector<8x2x8xf32>
    %55 = math.exp %54 : vector<8x2x8xf32>
    %cst_15 = arith.constant dense<0.000000e+00> : vector<8x2xf32>
    %56 = vector.multi_reduction <add>, %55, %cst_15 [2] : vector<8x2x8xf32> to vector<8x2xf32>
    %57 = vector.shape_cast %56 : vector<8x2xf32> to vector<8x2x1xf32>
    %58 = vector.broadcast %57 : vector<8x2x1xf32> to vector<8x2x8xf32>
    %59 = arith.divf %55, %58 : vector<8x2x8xf32>
    %60 = arith.mulf %59, %7 : vector<8x2x8xf32>
    %cst_16 = arith.constant dense<0.000000e+00> : vector<8x2xf32>
    %61 = vector.multi_reduction <add>, %60, %cst_16 [2] : vector<8x2x8xf32> to vector<8x2xf32>
    %62 = vector.shape_cast %61 : vector<8x2xf32> to vector<8x2x1xf32>
    %63 = arith.mulf %62, %62 : vector<8x2x1xf32>
    %64 = math.absf %62 : vector<8x2x1xf32>
    %65 = arith.mulf %62, %64 : vector<8x2x1xf32>
    %cst_17 = arith.constant 1.000000e+00 : f32
    %66 = vector.broadcast %cst_17 : f32 to vector<8x2x1xf32>
    %67 = arith.addf %66, %63 : vector<8x2x1xf32>
    %68 = arith.divf %65, %67 : vector<8x2x1xf32>
    %69 = vector.shape_cast %68 : vector<8x2x1xf32> to vector<8x2xf32>
    %c0_18 = arith.constant 0 : index
    %c0_19 = arith.constant 0 : index
    %70 = vector.load %arg2[%c0_18, %c0_19] : memref<8x2xf32, #tpu.memory_space<vmem>>, vector<8x2xf32>
    tpu.vector_store %arg2[%c0_18, %c0_19], %69 {strides = array<i32>} : memref<8x2xf32, #tpu.memory_space<vmem>>, vector<8x2xf32>,
    return
  }
}

</mosaic_0001>

<llo_original>
// kernel: tpu_custom_call.1
$region0: #{tpu_custom_call.1}
  #allocation0 [shape = 'u32[]', space=smem, size = 0x4, offset = 0x4, fixed_abs, tag = 'smem constant byte address 0x4 - core index']
  #allocation1 [shape = 'u32[144,128]{1,0:T(1,128)}', space=vmem, size = 0x12000, scoped, tag = 'internal scratch']
  %s0 = inlined_call_operand.hbm [shape: f32[2,8,32], index: 0, kind: input, shape index: {}]
  %s1 = inlined_call_operand.hbm [shape: f32[8,8,32], index: 1, kind: input, shape index: {}]
  %s2 = inlined_call_operand.vmem [shape: f32[8,2], index: 2, kind: output, shape index: {}]
  %s3 = sld [smem:[#allocation0]]
  $region26: #{tpu_custom_call.1} parent=0
    _
  %s5 = ssub.s32 1, %s3
  %s6 = scalar_select 0, %s5, %s3
  $region1: #{tpu_custom_call.1} parent=0
    #allocation2 [shape = 'u8[8192]{0}', space=vmem, size = 0x2000, scoped, tag = 'input window, operand 0, single buffered']
    #allocation3 [shape = 's32[1]{0}', space=sflag, size = 0x4, scoped, tag = 'scoped memory for tpu_custom_call.1']
    #allocation4 [shape = 'u8[32768]{0}', space=vmem, size = 0x8000, scoped, tag = 'input window, operand 1, single buffered']
    #allocation5 [shape = 's32[1]{0}', space=sflag, size = 0x4, scoped, tag = 'scoped memory for tpu_custom_call.1']
    %7 = vsyncpa [#allocation3], 0
    %8 = vsyncpa [#allocation5], 0
    // Predicated region
    $region2: #{tpu_custom_call.1} parent=1 // pred_check
      _
    $region3: #{tpu_custom_call.1} parent=1 // pred_check_branch
      %10 = sbr.rel (0) target = $region5
    $region4: #{tpu_custom_call.1} parent=1 // pred_region
      %s12 = ssub.s32 256, 256
      %13 = vsyncadd [#allocation3], %s12
      %s14 = sshll.u32 [#allocation2], 4
      %s15 = int_to_ptr.vmem [resolvable:$true] %s14
      %20 = dma.hbm_to_vmem [thread:$0]  %s0, 256, %s15, [#allocation3], 128, 128, 8
    $region5: #{tpu_custom_call.1} parent=1 // pred_fallthru
      _
    // Predicated region
    $region6: #{tpu_custom_call.1} parent=1 // pred_check
      _
    $region7: #{tpu_custom_call.1} parent=1 // pred_check_branch
      %22 = sbr.rel (0) target = $region9
    $region8: #{tpu_custom_call.1} parent=1 // pred_region
      %s24 = ssub.s32 1024, 1024
      %25 = vsyncadd [#allocation5], %s24
      %s26 = sshll.u32 [#allocation4], 4
      %s27 = int_to_ptr.vmem [resolvable:$true] %s26
      %32 = dma.hbm_to_vmem [thread:$0]  %s1, 1024, %s27, [#allocation5], 128, 128, 8
    $region9: #{tpu_custom_call.1} parent=1 // pred_fallthru
      _
    // Predicated region
    $region10: #{tpu_custom_call.1} parent=1 // pred_check
      _
    $region11: #{tpu_custom_call.1} parent=1 // pred_check_branch
      %34 = sbr.rel (0) target = $region13
    $region12: #{tpu_custom_call.1} parent=1 // pred_region
      %35 = dma.done [#allocation3], 256
    $region13: #{tpu_custom_call.1} parent=1 // pred_fallthru
      _
    // Predicated region
    $region14: #{tpu_custom_call.1} parent=1 // pred_check
      _
    $region15: #{tpu_custom_call.1} parent=1 // pred_check_branch
      %37 = sbr.rel (0) target = $region17
    $region16: #{tpu_custom_call.1} parent=1 // pred_region
      %38 = dma.done [#allocation5], 1024
    $region17: #{tpu_custom_call.1} parent=1 // pred_fallthru
      _
    %v39 = vld [vmem:[#allocation2] sm:$0xff]
    %v40 = vld [vmem:[#allocation2 + $0x8] sm:$0xff]
    %v41 = vld [vmem:[#allocation4] sm:$0xff]
    %v42 = vld [vmem:[#allocation4 + $0x8] sm:$0xff]
    %v43 = vld [vmem:[#allocation4 + $0x10] sm:$0xff]
    %v44 = vld [vmem:[#allocation4 + $0x18] sm:$0xff]
    %v45 = vld [vmem:[#allocation4 + $0x20] sm:$0xff]
    %v46 = vld [vmem:[#allocation4 + $0x28] sm:$0xff]
    %v47 = vld [vmem:[#allocation4 + $0x30] sm:$0xff]
    %v48 = vld [vmem:[#allocation4 + $0x38] sm:$0xff]
    %v49 = vmul.f32 %v39, %v41
    %v50 = vmul.f32 %v40, %v41
    %v51 = vmul.f32 %v39, %v42
    %v52 = vmul.f32 %v40, %v42
    %v53 = vmul.f32 %v39, %v43
    %v54 = vmul.f32 %v40, %v43
    %v55 = vmul.f32 %v39, %v44
    %v56 = vmul.f32 %v40, %v44
    %v57 = vmul.f32 %v39, %v45
    %v58 = vmul.f32 %v40, %v45
    %v59 = vmul.f32 %v39, %v46
    %v60 = vmul.f32 %v40, %v46
    %v61 = vmul.f32 %v39, %v47
    %v62 = vmul.f32 %v40, %v47
    %v63 = vmul.f32 %v39, %v48
    %v64 = vmul.f32 %v40, %v48
    %vm65 = vcmask 261120
    %v66 = vsel %vm65, %v49, 0.0
    %67 = vadd.xlane.f32.xlu0 %v66
    %v68 = vpop.xlane.xlu0 %67
    %v69 = vsel %vm65, %v50, 0.0
    %70 = vadd.xlane.f32.xlu0 %v69
    %v71 = vpop.xlane.xlu0 %70
    %v72 = vsel %vm65, %v51, 0.0
    %73 = vadd.xlane.f32.xlu0 %v72
    %v74 = vpop.xlane.xlu0 %73
    %v75 = vsel %vm65, %v52, 0.0
    %76 = vadd.xlane.f32.xlu0 %v75
    %v77 = vpop.xlane.xlu0 %76
    %v78 = vsel %vm65, %v53, 0.0
    %79 = vadd.xlane.f32.xlu0 %v78
    %v80 = vpop.xlane.xlu0 %79
    %v81 = vsel %vm65, %v54, 0.0
    %82 = vadd.xlane.f32.xlu0 %v81
    %v83 = vpop.xlane.xlu0 %82
    %v84 = vsel %vm65, %v55, 0.0
    %85 = vadd.xlane.f32.xlu0 %v84
    %v86 = vpop.xlane.xlu0 %85
    %v87 = vsel %vm65, %v56, 0.0
    %88 = vadd.xlane.f32.xlu0 %v87
    %v89 = vpop.xlane.xlu0 %88
    %v90 = vsel %vm65, %v57, 0.0
    %91 = vadd.xlane.f32.xlu0 %v90
    %v92 = vpop.xlane.xlu0 %91
    %v93 = vsel %vm65, %v58, 0.0
    %94 = vadd.xlane.f32.xlu0 %v93
    %v95 = vpop.xlane.xlu0 %94
    %v96 = vsel %vm65, %v59, 0.0
    %97 = vadd.xlane.f32.xlu0 %v96
    %v98 = vpop.xlane.xlu0 %97
    %v99 = vsel %vm65, %v60, 0.0
    %100 = vadd.xlane.f32.xlu0 %v99
    %v101 = vpop.xlane.xlu0 %100
    %v102 = vsel %vm65, %v61, 0.0
    %103 = vadd.xlane.f32.xlu0 %v102
    %v104 = vpop.xlane.xlu0 %103
    %v105 = vsel %vm65, %v62, 0.0
    %106 = vadd.xlane.f32.xlu0 %v105
    %v107 = vpop.xlane.xlu0 %106
    %v108 = vsel %vm65, %v63, 0.0
    %109 = vadd.xlane.f32.xlu0 %v108
    %v110 = vpop.xlane.xlu0 %109
    %v111 = vsel %vm65, %v64, 0.0
    %112 = vadd.xlane.f32.xlu0 %v111
    %v113 = vpop.xlane.xlu0 %112
    %vm114 = vcmask 64512
    %v115 = vsel %vm114, 1.0, 0.0
    %116 = vadd.xlane.f32.xlu0 %v115
    %v117 = vpop.xlane.xlu0 %116
    %v118 = vrcp.pop %v117
    %v119 = vmul.f32 1.0, %v118
    %v120 = vmul.f32 %v119, %v68
    %v121 = vmul.f32 %v119, %v71
    %v122 = vmul.f32 %v119, %v74
    %v123 = vmul.f32 %v119, %v77
    %v124 = vmul.f32 %v119, %v80
    %v125 = vmul.f32 %v119, %v83
    %v126 = vmul.f32 %v119, %v86
    %v127 = vmul.f32 %v119, %v89
    %v128 = vmul.f32 %v119, %v92
    %v129 = vmul.f32 %v119, %v95
    %v130 = vmul.f32 %v119, %v98
    %v131 = vmul.f32 %v119, %v101
    %v132 = vmul.f32 %v119, %v104
    %v133 = vmul.f32 %v119, %v107
    %v134 = vmul.f32 %v119, %v110
    %v135 = vmul.f32 %v119, %v113
    %v152 = vlaneseq
    %v153 = vand.u32 %v152, 127
    %v154 = vlaneseq
    %v155 = vshrl.u32 %v154, 7
    %v156 = vsub.s32 %v153, %v155
    %v157 = vrot.slane %v120, %v156
    %v158 = vlaneseq
    %v159 = vshrl.u32 %v158, 7
    %v160 = vsub.s32 %v153, %v159
    %v161 = vrot.slane %v121, %v160
    %v162 = vlaneseq
    %v163 = vshrl.u32 %v162, 7
    %v164 = vsub.s32 %v153, %v163
    %v165 = vrot.slane %v122, %v164
    %v166 = vlaneseq
    %v167 = vshrl.u32 %v166, 7
    %v168 = vsub.s32 %v153, %v167
    %v169 = vrot.slane %v123, %v168
    %v170 = vlaneseq
    %v171 = vshrl.u32 %v170, 7
    %v172 = vsub.s32 %v153, %v171
    %v173 = vrot.slane %v124, %v172
    %v174 = vlaneseq
    %v175 = vshrl.u32 %v174, 7
    %v176 = vsub.s32 %v153, %v175
    %v177 = vrot.slane %v125, %v176
    %v178 = vlaneseq
    %v179 = vshrl.u32 %v178, 7
    %v180 = vsub.s32 %v153, %v179
    %v181 = vrot.slane %v126, %v180
    %v182 = vlaneseq
    %v183 = vshrl.u32 %v182, 7
    %v184 = vsub.s32 %v153, %v183
    %v185 = vrot.slane %v127, %v184
    %v186 = vlaneseq
    %v187 = vshrl.u32 %v186, 7
    %v188 = vsub.s32 %v153, %v187
    %v189 = vrot.slane %v128, %v188
    %v190 = vlaneseq
    %v191 = vshrl.u32 %v190, 7
    %v192 = vsub.s32 %v153, %v191
    %v193 = vrot.slane %v129, %v192
    %v194 = vlaneseq
    %v195 = vshrl.u32 %v194, 7
    %v196 = vsub.s32 %v153, %v195
    %v197 = vrot.slane %v130, %v196
    %v198 = vlaneseq
    %v199 = vshrl.u32 %v198, 7
    %v200 = vsub.s32 %v153, %v199
    %v201 = vrot.slane %v131, %v200
    %v202 = vlaneseq
    %v203 = vshrl.u32 %v202, 7
    %v204 = vsub.s32 %v153, %v203
    %v205 = vrot.slane %v132, %v204
    %v206 = vlaneseq
    %v207 = vshrl.u32 %v206, 7
    %v208 = vsub.s32 %v153, %v207
    %v209 = vrot.slane %v133, %v208
    %v210 = vlaneseq
    %v211 = vshrl.u32 %v210, 7
    %v212 = vsub.s32 %v153, %v211
    %v213 = vrot.slane %v134, %v212
    %v214 = vlaneseq
    %v215 = vshrl.u32 %v214, 7
    %v216 = vsub.s32 %v153, %v215
    %v217 = vrot.slane %v135, %v216
    %vm218 = vcmask 1041409
    %v219 = vsel %vm218, %v161, %v157
    %v220 = vsel %vm218, %v169, %v165
    %v221 = vsel %vm218, %v177, %v173
    %v222 = vsel %vm218, %v185, %v181
    %v223 = vsel %vm218, %v193, %v189
    %v224 = vsel %vm218, %v201, %v197
    %v225 = vsel %vm218, %v209, %v205
    %v226 = vsel %vm218, %v217, %v213
    %vm235 = vcmask 58368
    %v236 = vsel %vm235, %v219, 0.0
    %237 = vadd.xlane.f32.xlu0 %v236
    %v238 = vpop.xlane.xlu0 %237
    %v239 = vsel %vm235, %v220, 0.0
    %240 = vadd.xlane.f32.xlu0 %v239
    %v241 = vpop.xlane.xlu0 %240
    %v242 = vsel %vm235, %v221, 0.0
    %243 = vadd.xlane.f32.xlu0 %v242
    %v244 = vpop.xlane.xlu0 %243
    %v245 = vsel %vm235, %v222, 0.0
    %246 = vadd.xlane.f32.xlu0 %v245
    %v247 = vpop.xlane.xlu0 %246
    %v248 = vsel %vm235, %v223, 0.0
    %249 = vadd.xlane.f32.xlu0 %v248
    %v250 = vpop.xlane.xlu0 %249
    %v251 = vsel %vm235, %v224, 0.0
    %252 = vadd.xlane.f32.xlu0 %v251
    %v253 = vpop.xlane.xlu0 %252
    %v254 = vsel %vm235, %v225, 0.0
    %255 = vadd.xlane.f32.xlu0 %v254
    %v256 = vpop.xlane.xlu0 %255
    %v257 = vsel %vm235, %v226, 0.0
    %258 = vadd.xlane.f32.xlu0 %v257
    %v259 = vpop.xlane.xlu0 %258
    %v260 = vmul.f32 %v238, %v238
    %v261 = vmul.f32 %v241, %v241
    %v262 = vmul.f32 %v244, %v244
    %v263 = vmul.f32 %v247, %v247
    %v264 = vmul.f32 %v250, %v250
    %v265 = vmul.f32 %v253, %v253
    %v266 = vmul.f32 %v256, %v256
    %v267 = vmul.f32 %v259, %v259
    %v268 = vand.u32 2147483647, %v238
    %v269 = vand.u32 2147483647, %v241
    %v270 = vand.u32 2147483647, %v244
    %v271 = vand.u32 2147483647, %v247
    %v272 = vand.u32 2147483647, %v250
    %v273 = vand.u32 2147483647, %v253
    %v274 = vand.u32 2147483647, %v256
    %v275 = vand.u32 2147483647, %v259
    %v276 = vmul.f32 %v238, %v268
    %v277 = vmul.f32 %v241, %v269
    %v278 = vmul.f32 %v244, %v270
    %v279 = vmul.f32 %v247, %v271
    %v280 = vmul.f32 %v250, %v272
    %v281 = vmul.f32 %v253, %v273
    %v282 = vmul.f32 %v256, %v274
    %v283 = vmul.f32 %v259, %v275
    %v284 = vadd.f32 %v260, 1.0
    %v285 = vadd.f32 %v261, 1.0
    %v286 = vadd.f32 %v262, 1.0
    %v287 = vadd.f32 %v263, 1.0
    %v288 = vadd.f32 %v264, 1.0
    %v289 = vadd.f32 %v265, 1.0
    %v290 = vadd.f32 %v266, 1.0
    %v291 = vadd.f32 %v267, 1.0
    %v292 = vrcp.pop %v284
    %v293 = vmul.f32 %v276, %v292
    %v294 = vrcp.pop %v285
    %v295 = vmul.f32 %v277, %v294
    %v296 = vrcp.pop %v286
    %v297 = vmul.f32 %v278, %v296
    %v298 = vrcp.pop %v287
    %v299 = vmul.f32 %v279, %v298
    %v300 = vrcp.pop %v288
    %v301 = vmul.f32 %v280, %v300
    %v302 = vrcp.pop %v289
    %v303 = vmul.f32 %v281, %v302
    %v304 = vrcp.pop %v290
    %v305 = vmul.f32 %v282, %v304
    %v306 = vrcp.pop %v291
    %v307 = vmul.f32 %v283, %v306
    %v316 = vlaneseq
    %v317 = vshrl.u32 %v316, 7
    %v318 = vsub.s32 0, %v317
    %v319 = vrot.slane %v293, %v318
    %v320 = vlaneseq
    %v321 = vshrl.u32 %v320, 7
    %v322 = vsub.s32 1, %v321
    %v323 = vrot.slane %v293, %v322
    %v324 = vlaneseq
    %v325 = vshrl.u32 %v324, 7
    %v326 = vsub.s32 0, %v325
    %v327 = vrot.slane %v295, %v326
    %v328 = vlaneseq
    %v329 = vshrl.u32 %v328, 7
    %v330 = vsub.s32 1, %v329
    %v331 = vrot.slane %v295, %v330
    %v332 = vlaneseq
    %v333 = vshrl.u32 %v332, 7
    %v334 = vsub.s32 0, %v333
    %v335 = vrot.slane %v297, %v334
    %v336 = vlaneseq
    %v337 = vshrl.u32 %v336, 7
    %v338 = vsub.s32 1, %v337
    %v339 = vrot.slane %v297, %v338
    %v340 = vlaneseq
    %v341 = vshrl.u32 %v340, 7
    %v342 = vsub.s32 0, %v341
    %v343 = vrot.slane %v299, %v342
    %v344 = vlaneseq
    %v345 = vshrl.u32 %v344, 7
    %v346 = vsub.s32 1, %v345
    %v347 = vrot.slane %v299, %v346
    %v348 = vlaneseq
    %v349 = vshrl.u32 %v348, 7
    %v350 = vsub.s32 0, %v349
    %v351 = vrot.slane %v301, %v350
    %v352 = vlaneseq
    %v353 = vshrl.u32 %v352, 7
    %v354 = vsub.s32 1, %v353
    %v355 = vrot.slane %v301, %v354
    %v356 = vlaneseq
    %v357 = vshrl.u32 %v356, 7
    %v358 = vsub.s32 0, %v357
    %v359 = vrot.slane %v303, %v358
    %v360 = vlaneseq
    %v361 = vshrl.u32 %v360, 7
    %v362 = vsub.s32 1, %v361
    %v363 = vrot.slane %v303, %v362
    %v364 = vlaneseq
    %v365 = vshrl.u32 %v364, 7
    %v366 = vsub.s32 0, %v365
    %v367 = vrot.slane %v305, %v366
    %v368 = vlaneseq
    %v369 = vshrl.u32 %v368, 7
    %v370 = vsub.s32 1, %v369
    %v371 = vrot.slane %v305, %v370
    %v372 = vlaneseq
    %v373 = vshrl.u32 %v372, 7
    %v374 = vsub.s32 0, %v373
    %v375 = vrot.slane %v307, %v374
    %v376 = vlaneseq
    %v377 = vshrl.u32 %v376, 7
    %v378 = vsub.s32 1, %v377
    %v379 = vrot.slane %v307, %v378
    %v396 = vmul.f32 %v68, %v319
    %v397 = vmul.f32 %v71, %v323
    %v398 = vmul.f32 %v74, %v327
    %v399 = vmul.f32 %v77, %v331
    %v400 = vmul.f32 %v80, %v335
    %v401 = vmul.f32 %v83, %v339
    %v402 = vmul.f32 %v86, %v343
    %v403 = vmul.f32 %v89, %v347
    %v404 = vmul.f32 %v92, %v351
    %v405 = vmul.f32 %v95, %v355
    %v406 = vmul.f32 %v98, %v359
    %v407 = vmul.f32 %v101, %v363
    %v408 = vmul.f32 %v104, %v367
    %v409 = vmul.f32 %v107, %v371
    %v410 = vmul.f32 %v110, %v375
    %v411 = vmul.f32 %v113, %v379
    %v412 = vadd.f32 %v396, 0.0
    %v413 = vadd.f32 %v397, 0.0
    %v414 = vadd.f32 %v398, 0.0
    %v415 = vadd.f32 %v399, 0.0
    %v416 = vadd.f32 %v400, 0.0
    %v417 = vadd.f32 %v401, 0.0
    %v418 = vadd.f32 %v402, 0.0
    %v419 = vadd.f32 %v403, 0.0
    %v420 = vadd.f32 %v404, 0.0
    %v421 = vadd.f32 %v405, 0.0
    %v422 = vadd.f32 %v406, 0.0
    %v423 = vadd.f32 %v407, 0.0
    %v424 = vadd.f32 %v408, 0.0
    %v425 = vadd.f32 %v409, 0.0
    %v426 = vadd.f32 %v410, 0.0
    %v427 = vadd.f32 %v411, 0.0
    %444 = vset.pattern.permute.xlu0 0
    %445 = vperm.xlu0 %444, %v412
    %v446 = vpop.permute.xlu0 %445
    %447 = vset.pattern.permute.xlu0 0
    %448 = vperm.xlu0 %447, %v413
    %v449 = vpop.permute.xlu0 %448
    %450 = vset.pattern.permute.xlu0 0
    %451 = vperm.xlu0 %450, %v414
    %v452 = vpop.permute.xlu0 %451
    %453 = vset.pattern.permute.xlu0 0
    %454 = vperm.xlu0 %453, %v415
    %v455 = vpop.permute.xlu0 %454
    %456 = vset.pattern.permute.xlu0 0
    %457 = vperm.xlu0 %456, %v416
    %v458 = vpop.permute.xlu0 %457
    %459 = vset.pattern.permute.xlu0 0
    %460 = vperm.xlu0 %459, %v417
    %v461 = vpop.permute.xlu0 %460
    %462 = vset.pattern.permute.xlu0 0
    %463 = vperm.xlu0 %462, %v418
    %v464 = vpop.permute.xlu0 %463
    %465 = vset.pattern.permute.xlu0 0
    %466 = vperm.xlu0 %465, %v419
    %v467 = vpop.permute.xlu0 %466
    %468 = vset.pattern.permute.xlu0 0
    %469 = vperm.xlu0 %468, %v420
    %v470 = vpop.permute.xlu0 %469
    %471 = vset.pattern.permute.xlu0 0
    %472 = vperm.xlu0 %471, %v421
    %v473 = vpop.permute.xlu0 %472
    %474 = vset.pattern.permute.xlu0 0
    %475 = vperm.xlu0 %474, %v422
    %v476 = vpop.permute.xlu0 %475
    %477 = vset.pattern.permute.xlu0 0
    %478 = vperm.xlu0 %477, %v423
    %v479 = vpop.permute.xlu0 %478
    %480 = vset.pattern.permute.xlu0 0
    %481 = vperm.xlu0 %480, %v424
    %v482 = vpop.permute.xlu0 %481
    %483 = vset.pattern.permute.xlu0 0
    %484 = vperm.xlu0 %483, %v425
    %v485 = vpop.permute.xlu0 %484
    %486 = vset.pattern.permute.xlu0 0
    %487 = vperm.xlu0 %486, %v426
    %v488 = vpop.permute.xlu0 %487
    %489 = vset.pattern.permute.xlu0 0
    %490 = vperm.xlu0 %489, %v427
    %v491 = vpop.permute.xlu0 %490
    %v492 = vlaneseq
    %v493 = vshrl.u32 %v492, 7
    %v494 = vsub.s32 %v153, %v493
    %v495 = vrot.slane %v446, %v494
    %v496 = vlaneseq
    %v497 = vshrl.u32 %v496, 7
    %v498 = vsub.s32 %v153, %v497
    %v499 = vrot.slane %v449, %v498
    %v500 = vlaneseq
    %v501 = vshrl.u32 %v500, 7
    %v502 = vsub.s32 %v153, %v501
    %v503 = vrot.slane %v452, %v502
    %v504 = vlaneseq
    %v505 = vshrl.u32 %v504, 7
    %v506 = vsub.s32 %v153, %v505
    %v507 = vrot.slane %v455, %v506
    %v508 = vlaneseq
    %v509 = vshrl.u32 %v508, 7
    %v510 = vsub.s32 %v153, %v509
    %v511 = vrot.slane %v458, %v510
    %v512 = vlaneseq
    %v513 = vshrl.u32 %v512, 7
    %v514 = vsub.s32 %v153, %v513
    %v515 = vrot.slane %v461, %v514
    %v516 = vlaneseq
    %v517 = vshrl.u32 %v516, 7
    %v518 = vsub.s32 %v153, %v517
    %v519 = vrot.slane %v464, %v518
    %v520 = vlaneseq
    %v521 = vshrl.u32 %v520, 7
    %v522 = vsub.s32 %v153, %v521
    %v523 = vrot.slane %v467, %v522
    %v524 = vlaneseq
    %v525 = vshrl.u32 %v524, 7
    %v526 = vsub.s32 %v153, %v525
    %v527 = vrot.slane %v470, %v526
    %v528 = vlaneseq
    %v529 = vshrl.u32 %v528, 7
    %v530 = vsub.s32 %v153, %v529
    %v531 = vrot.slane %v473, %v530
    %v532 = vlaneseq
    %v533 = vshrl.u32 %v532, 7
    %v534 = vsub.s32 %v153, %v533
    %v535 = vrot.slane %v476, %v534
    %v536 = vlaneseq
    %v537 = vshrl.u32 %v536, 7
    %v538 = vsub.s32 %v153, %v537
    %v539 = vrot.slane %v479, %v538
    %v540 = vlaneseq
    %v541 = vshrl.u32 %v540, 7
    %v542 = vsub.s32 %v153, %v541
    %v543 = vrot.slane %v482, %v542
    %v544 = vlaneseq
    %v545 = vshrl.u32 %v544, 7
    %v546 = vsub.s32 %v153, %v545
    %v547 = vrot.slane %v485, %v546
    %v548 = vlaneseq
    %v549 = vshrl.u32 %v548, 7
    %v550 = vsub.s32 %v153, %v549
    %v551 = vrot.slane %v488, %v550
    %v552 = vlaneseq
    %v553 = vshrl.u32 %v552, 7
    %v554 = vsub.s32 %v153, %v553
    %v555 = vrot.slane %v491, %v554
    %v556 = vsel %vm218, %v499, %v495
    %v557 = vsel %vm218, %v507, %v503
    %v558 = vsel %vm218, %v515, %v511
    %v559 = vsel %vm218, %v523, %v519
    %v560 = vsel %vm218, %v531, %v527
    %v561 = vsel %vm218, %v539, %v535
    %v562 = vsel %vm218, %v547, %v543
    %v563 = vsel %vm218, %v555, %v551
    %v572 = vsel %vm235, %v556, -inf
    %573 = vmax.xlane.f32.xlu0 %v572
    %v574 = vpop.xlane.xlu0 %573
    %v575 = vsel %vm235, %v557, -inf
    %576 = vmax.xlane.f32.xlu0 %v575
    %v577 = vpop.xlane.xlu0 %576
    %v578 = vsel %vm235, %v558, -inf
    %579 = vmax.xlane.f32.xlu0 %v578
    %v580 = vpop.xlane.xlu0 %579
    %v581 = vsel %vm235, %v559, -inf
    %582 = vmax.xlane.f32.xlu0 %v581
    %v583 = vpop.xlane.xlu0 %582
    %v584 = vsel %vm235, %v560, -inf
    %585 = vmax.xlane.f32.xlu0 %v584
    %v586 = vpop.xlane.xlu0 %585
    %v587 = vsel %vm235, %v561, -inf
    %588 = vmax.xlane.f32.xlu0 %v587
    %v589 = vpop.xlane.xlu0 %588
    %v590 = vsel %vm235, %v562, -inf
    %591 = vmax.xlane.f32.xlu0 %v590
    %v592 = vpop.xlane.xlu0 %591
    %v593 = vsel %vm235, %v563, -inf
    %594 = vmax.xlane.f32.xlu0 %v593
    %v595 = vpop.xlane.xlu0 %594
    %v604 = vlaneseq
    %v605 = vshrl.u32 %v604, 7
    %v606 = vsub.s32 0, %v605
    %v607 = vrot.slane %v574, %v606
    %v608 = vlaneseq
    %v609 = vshrl.u32 %v608, 7
    %v610 = vsub.s32 1, %v609
    %v611 = vrot.slane %v574, %v610
    %v612 = vlaneseq
    %v613 = vshrl.u32 %v612, 7
    %v614 = vsub.s32 0, %v613
    %v615 = vrot.slane %v577, %v614
    %v616 = vlaneseq
    %v617 = vshrl.u32 %v616, 7
    %v618 = vsub.s32 1, %v617
    %v619 = vrot.slane %v577, %v618
    %v620 = vlaneseq
    %v621 = vshrl.u32 %v620, 7
    %v622 = vsub.s32 0, %v621
    %v623 = vrot.slane %v580, %v622
    %v624 = vlaneseq
    %v625 = vshrl.u32 %v624, 7
    %v626 = vsub.s32 1, %v625
    %v627 = vrot.slane %v580, %v626
    %v628 = vlaneseq
    %v629 = vshrl.u32 %v628, 7
    %v630 = vsub.s32 0, %v629
    %v631 = vrot.slane %v583, %v630
    %v632 = vlaneseq
    %v633 = vshrl.u32 %v632, 7
    %v634 = vsub.s32 1, %v633
    %v635 = vrot.slane %v583, %v634
    %v636 = vlaneseq
    %v637 = vshrl.u32 %v636, 7
    %v638 = vsub.s32 0, %v637
    %v639 = vrot.slane %v586, %v638
    %v640 = vlaneseq
    %v641 = vshrl.u32 %v640, 7
    %v642 = vsub.s32 1, %v641
    %v643 = vrot.slane %v586, %v642
    %v644 = vlaneseq
    %v645 = vshrl.u32 %v644, 7
    %v646 = vsub.s32 0, %v645
    %v647 = vrot.slane %v589, %v646
    %v648 = vlaneseq
    %v649 = vshrl.u32 %v648, 7
    %v650 = vsub.s32 1, %v649
    %v651 = vrot.slane %v589, %v650
    %v652 = vlaneseq
    %v653 = vshrl.u32 %v652, 7
    %v654 = vsub.s32 0, %v653
    %v655 = vrot.slane %v592, %v654
    %v656 = vlaneseq
    %v657 = vshrl.u32 %v656, 7
    %v658 = vsub.s32 1, %v657
    %v659 = vrot.slane %v592, %v658
    %v660 = vlaneseq
    %v661 = vshrl.u32 %v660, 7
    %v662 = vsub.s32 0, %v661
    %v663 = vrot.slane %v595, %v662
    %v664 = vlaneseq
    %v665 = vshrl.u32 %v664, 7
    %v666 = vsub.s32 1, %v665
    %v667 = vrot.slane %v595, %v666
    %v684 = vsub.f32 %v412, %v607
    %v685 = vsub.f32 %v413, %v611
    %v686 = vsub.f32 %v414, %v615
    %v687 = vsub.f32 %v415, %v619
    %v688 = vsub.f32 %v416, %v623
    %v689 = vsub.f32 %v417, %v627
    %v690 = vsub.f32 %v418, %v631
    %v691 = vsub.f32 %v419, %v635
    %v692 = vsub.f32 %v420, %v639
    %v693 = vsub.f32 %v421, %v643
    %v694 = vsub.f32 %v422, %v647
    %v695 = vsub.f32 %v423, %v651
    %v696 = vsub.f32 %v424, %v655
    %v697 = vsub.f32 %v425, %v659
    %v698 = vsub.f32 %v426, %v663
    %v699 = vsub.f32 %v427, %v667
    %v700 = vmul.f32 %v684, 1.442695
    %v701 = vpow.pop %v700
    %v702 = vmul.f32 %v685, 1.442695
    %v703 = vpow.pop %v702
    %v704 = vmul.f32 %v686, 1.442695
    %v705 = vpow.pop %v704
    %v706 = vmul.f32 %v687, 1.442695
    %v707 = vpow.pop %v706
    %v708 = vmul.f32 %v688, 1.442695
    %v709 = vpow.pop %v708
    %v710 = vmul.f32 %v689, 1.442695
    %v711 = vpow.pop %v710
    %v712 = vmul.f32 %v690, 1.442695
    %v713 = vpow.pop %v712
    %v714 = vmul.f32 %v691, 1.442695
    %v715 = vpow.pop %v714
    %v716 = vmul.f32 %v692, 1.442695
    %v717 = vpow.pop %v716
    %v718 = vmul.f32 %v693, 1.442695
    %v719 = vpow.pop %v718
    %v720 = vmul.f32 %v694, 1.442695
    %v721 = vpow.pop %v720
    %v722 = vmul.f32 %v695, 1.442695
    %v723 = vpow.pop %v722
    %v724 = vmul.f32 %v696, 1.442695
    %v725 = vpow.pop %v724
    %v726 = vmul.f32 %v697, 1.442695
    %v727 = vpow.pop %v726
    %v728 = vmul.f32 %v698, 1.442695
    %v729 = vpow.pop %v728
    %v730 = vmul.f32 %v699, 1.442695
    %v731 = vpow.pop %v730
    %748 = vset.pattern.permute.xlu0 0
    %749 = vperm.xlu0 %748, %v701
    %v750 = vpop.permute.xlu0 %749
    %751 = vset.pattern.permute.xlu0 0
    %752 = vperm.xlu0 %751, %v703
    %v753 = vpop.permute.xlu0 %752
    %754 = vset.pattern.permute.xlu0 0
    %755 = vperm.xlu0 %754, %v705
    %v756 = vpop.permute.xlu0 %755
    %757 = vset.pattern.permute.xlu0 0
    %758 = vperm.xlu0 %757, %v707
    %v759 = vpop.permute.xlu0 %758
    %760 = vset.pattern.permute.xlu0 0
    %761 = vperm.xlu0 %760, %v709
    %v762 = vpop.permute.xlu0 %761
    %763 = vset.pattern.permute.xlu0 0
    %764 = vperm.xlu0 %763, %v711
    %v765 = vpop.permute.xlu0 %764
    %766 = vset.pattern.permute.xlu0 0
    %767 = vperm.xlu0 %766, %v713
    %v768 = vpop.permute.xlu0 %767
    %769 = vset.pattern.permute.xlu0 0
    %770 = vperm.xlu0 %769, %v715
    %v771 = vpop.permute.xlu0 %770
    %772 = vset.pattern.permute.xlu0 0
    %773 = vperm.xlu0 %772, %v717
    %v774 = vpop.permute.xlu0 %773
    %775 = vset.pattern.permute.xlu0 0
    %776 = vperm.xlu0 %775, %v719
    %v777 = vpop.permute.xlu0 %776
    %778 = vset.pattern.permute.xlu0 0
    %779 = vperm.xlu0 %778, %v721
    %v780 = vpop.permute.xlu0 %779
    %781 = vset.pattern.permute.xlu0 0
    %782 = vperm.xlu0 %781, %v723
    %v783 = vpop.permute.xlu0 %782
    %784 = vset.pattern.permute.xlu0 0
    %785 = vperm.xlu0 %784, %v725
    %v786 = vpop.permute.xlu0 %785
    %787 = vset.pattern.permute.xlu0 0
    %788 = vperm.xlu0 %787, %v727
    %v789 = vpop.permute.xlu0 %788
    %790 = vset.pattern.permute.xlu0 0
    %791 = vperm.xlu0 %790, %v729
    %v792 = vpop.permute.xlu0 %791
    %793 = vset.pattern.permute.xlu0 0
    %794 = vperm.xlu0 %793, %v731
    %v795 = vpop.permute.xlu0 %794
    %v796 = vlaneseq
    %v797 = vshrl.u32 %v796, 7
    %v798 = vsub.s32 %v153, %v797
    %v799 = vrot.slane %v750, %v798
    %v800 = vlaneseq
    %v801 = vshrl.u32 %v800, 7
    %v802 = vsub.s32 %v153, %v801
    %v803 = vrot.slane %v753, %v802
    %v804 = vlaneseq
    %v805 = vshrl.u32 %v804, 7
    %v806 = vsub.s32 %v153, %v805
    %v807 = vrot.slane %v756, %v806
    %v808 = vlaneseq
    %v809 = vshrl.u32 %v808, 7
    %v810 = vsub.s32 %v153, %v809
    %v811 = vrot.slane %v759, %v810
    %v812 = vlaneseq
    %v813 = vshrl.u32 %v812, 7
    %v814 = vsub.s32 %v153, %v813
    %v815 = vrot.slane %v762, %v814
    %v816 = vlaneseq
    %v817 = vshrl.u32 %v816, 7
    %v818 = vsub.s32 %v153, %v817
    %v819 = vrot.slane %v765, %v818
    %v820 = vlaneseq
    %v821 = vshrl.u32 %v820, 7
    %v822 = vsub.s32 %v153, %v821
    %v823 = vrot.slane %v768, %v822
    %v824 = vlaneseq
    %v825 = vshrl.u32 %v824, 7
    %v826 = vsub.s32 %v153, %v825
    %v827 = vrot.slane %v771, %v826
    %v828 = vlaneseq
    %v829 = vshrl.u32 %v828, 7
    %v830 = vsub.s32 %v153, %v829
    %v831 = vrot.slane %v774, %v830
    %v832 = vlaneseq
    %v833 = vshrl.u32 %v832, 7
    %v834 = vsub.s32 %v153, %v833
    %v835 = vrot.slane %v777, %v834
    %v836 = vlaneseq
    %v837 = vshrl.u32 %v836, 7
    %v838 = vsub.s32 %v153, %v837
    %v839 = vrot.slane %v780, %v838
    %v840 = vlaneseq
    %v841 = vshrl.u32 %v840, 7
    %v842 = vsub.s32 %v153, %v841
    %v843 = vrot.slane %v783, %v842
    %v844 = vlaneseq
    %v845 = vshrl.u32 %v844, 7
    %v846 = vsub.s32 %v153, %v845
    %v847 = vrot.slane %v786, %v846
    %v848 = vlaneseq
    %v849 = vshrl.u32 %v848, 7
    %v850 = vsub.s32 %v153, %v849
    %v851 = vrot.slane %v789, %v850
    %v852 = vlaneseq
    %v853 = vshrl.u32 %v852, 7
    %v854 = vsub.s32 %v153, %v853
    %v855 = vrot.slane %v792, %v854
    %v856 = vlaneseq
    %v857 = vshrl.u32 %v856, 7
    %v858 = vsub.s32 %v153, %v857
    %v859 = vrot.slane %v795, %v858
    %v860 = vsel %vm218, %v803, %v799
    %v861 = vsel %vm218, %v811, %v807
    %v862 = vsel %vm218, %v819, %v815
    %v863 = vsel %vm218, %v827, %v823
    %v864 = vsel %vm218, %v835, %v831
    %v865 = vsel %vm218, %v843, %v839
    %v866 = vsel %vm218, %v851, %v847
    %v867 = vsel %vm218, %v859, %v855
    %v876 = vsel %vm235, %v860, 0.0
    %877 = vadd.xlane.f32.xlu0 %v876
    %v878 = vpop.xlane.xlu0 %877
    %v879 = vsel %vm235, %v861, 0.0
    %880 = vadd.xlane.f32.xlu0 %v879
    %v881 = vpop.xlane.xlu0 %880
    %v882 = vsel %vm235, %v862, 0.0
    %883 = vadd.xlane.f32.xlu0 %v882
    %v884 = vpop.xlane.xlu0 %883
    %v885 = vsel %vm235, %v863, 0.0
    %886 = vadd.xlane.f32.xlu0 %v885
    %v887 = vpop.xlane.xlu0 %886
    %v888 = vsel %vm235, %v864, 0.0
    %889 = vadd.xlane.f32.xlu0 %v888
    %v890 = vpop.xlane.xlu0 %889
    %v891 = vsel %vm235, %v865, 0.0
    %892 = vadd.xlane.f32.xlu0 %v891
    %v893 = vpop.xlane.xlu0 %892
    %v894 = vsel %vm235, %v866, 0.0
    %895 = vadd.xlane.f32.xlu0 %v894
    %v896 = vpop.xlane.xlu0 %895
    %v897 = vsel %vm235, %v867, 0.0
    %898 = vadd.xlane.f32.xlu0 %v897
    %v899 = vpop.xlane.xlu0 %898
    %v908 = vlaneseq
    %v909 = vshrl.u32 %v908, 7
    %v910 = vsub.s32 0, %v909
    %v911 = vrot.slane %v878, %v910
    %v912 = vlaneseq
    %v913 = vshrl.u32 %v912, 7
    %v914 = vsub.s32 1, %v913
    %v915 = vrot.slane %v878, %v914
    %v916 = vlaneseq
    %v917 = vshrl.u32 %v916, 7
    %v918 = vsub.s32 0, %v917
    %v919 = vrot.slane %v881, %v918
    %v920 = vlaneseq
    %v921 = vshrl.u32 %v920, 7
    %v922 = vsub.s32 1, %v921
    %v923 = vrot.slane %v881, %v922
    %v924 = vlaneseq
    %v925 = vshrl.u32 %v924, 7
    %v926 = vsub.s32 0, %v925
    %v927 = vrot.slane %v884, %v926
    %v928 = vlaneseq
    %v929 = vshrl.u32 %v928, 7
    %v930 = vsub.s32 1, %v929
    %v931 = vrot.slane %v884, %v930
    %v932 = vlaneseq
    %v933 = vshrl.u32 %v932, 7
    %v934 = vsub.s32 0, %v933
    %v935 = vrot.slane %v887, %v934
    %v936 = vlaneseq
    %v937 = vshrl.u32 %v936, 7
    %v938 = vsub.s32 1, %v937
    %v939 = vrot.slane %v887, %v938
    %v940 = vlaneseq
    %v941 = vshrl.u32 %v940, 7
    %v942 = vsub.s32 0, %v941
    %v943 = vrot.slane %v890, %v942
    %v944 = vlaneseq
    %v945 = vshrl.u32 %v944, 7
    %v946 = vsub.s32 1, %v945
    %v947 = vrot.slane %v890, %v946
    %v948 = vlaneseq
    %v949 = vshrl.u32 %v948, 7
    %v950 = vsub.s32 0, %v949
    %v951 = vrot.slane %v893, %v950
    %v952 = vlaneseq
    %v953 = vshrl.u32 %v952, 7
    %v954 = vsub.s32 1, %v953
    %v955 = vrot.slane %v893, %v954
    %v956 = vlaneseq
    %v957 = vshrl.u32 %v956, 7
    %v958 = vsub.s32 0, %v957
    %v959 = vrot.slane %v896, %v958
    %v960 = vlaneseq
    %v961 = vshrl.u32 %v960, 7
    %v962 = vsub.s32 1, %v961
    %v963 = vrot.slane %v896, %v962
    %v964 = vlaneseq
    %v965 = vshrl.u32 %v964, 7
    %v966 = vsub.s32 0, %v965
    %v967 = vrot.slane %v899, %v966
    %v968 = vlaneseq
    %v969 = vshrl.u32 %v968, 7
    %v970 = vsub.s32 1, %v969
    %v971 = vrot.slane %v899, %v970
    %v988 = vrcp.pop %v911
    %v989 = vmul.f32 %v701, %v988
    %v990 = vrcp.pop %v915
    %v991 = vmul.f32 %v703, %v990
    %v992 = vrcp.pop %v919
    %v993 = vmul.f32 %v705, %v992
    %v994 = vrcp.pop %v923
    %v995 = vmul.f32 %v707, %v994
    %v996 = vrcp.pop %v927
    %v997 = vmul.f32 %v709, %v996
    %v998 = vrcp.pop %v931
    %v999 = vmul.f32 %v711, %v998
    %v1000 = vrcp.pop %v935
    %v1001 = vmul.f32 %v713, %v1000
    %v1002 = vrcp.pop %v939
    %v1003 = vmul.f32 %v715, %v1002
    %v1004 = vrcp.pop %v943
    %v1005 = vmul.f32 %v717, %v1004
    %v1006 = vrcp.pop %v947
    %v1007 = vmul.f32 %v719, %v1006
    %v1008 = vrcp.pop %v951
    %v1009 = vmul.f32 %v721, %v1008
    %v1010 = vrcp.pop %v955
    %v1011 = vmul.f32 %v723, %v1010
    %v1012 = vrcp.pop %v959
    %v1013 = vmul.f32 %v725, %v1012
    %v1014 = vrcp.pop %v963
    %v1015 = vmul.f32 %v727, %v1014
    %v1016 = vrcp.pop %v967
    %v1017 = vmul.f32 %v729, %v1016
    %v1018 = vrcp.pop %v971
    %v1019 = vmul.f32 %v731, %v1018
    %v1020 = vmul.f32 %v989, %v68
    %v1021 = vmul.f32 %v991, %v71
    %v1022 = vmul.f32 %v993, %v74
    %v1023 = vmul.f32 %v995, %v77
    %v1024 = vmul.f32 %v997, %v80
    %v1025 = vmul.f32 %v999, %v83
    %v1026 = vmul.f32 %v1001, %v86
    %v1027 = vmul.f32 %v1003, %v89
    %v1028 = vmul.f32 %v1005, %v92
    %v1029 = vmul.f32 %v1007, %v95
    %v1030 = vmul.f32 %v1009, %v98
    %v1031 = vmul.f32 %v1011, %v101
    %v1032 = vmul.f32 %v1013, %v104
    %v1033 = vmul.f32 %v1015, %v107
    %v1034 = vmul.f32 %v1017, %v110
    %v1035 = vmul.f32 %v1019, %v113
    %1052 = vset.pattern.permute.xlu0 0
    %1053 = vperm.xlu0 %1052, %v1020
    %v1054 = vpop.permute.xlu0 %1053
    %1055 = vset.pattern.permute.xlu0 0
    %1056 = vperm.xlu0 %1055, %v1021
    %v1057 = vpop.permute.xlu0 %1056
    %1058 = vset.pattern.permute.xlu0 0
    %1059 = vperm.xlu0 %1058, %v1022
    %v1060 = vpop.permute.xlu0 %1059
    %1061 = vset.pattern.permute.xlu0 0
    %1062 = vperm.xlu0 %1061, %v1023
    %v1063 = vpop.permute.xlu0 %1062
    %1064 = vset.pattern.permute.xlu0 0
    %1065 = vperm.xlu0 %1064, %v1024
    %v1066 = vpop.permute.xlu0 %1065
    %1067 = vset.pattern.permute.xlu0 0
    %1068 = vperm.xlu0 %1067, %v1025
    %v1069 = vpop.permute.xlu0 %1068
    %1070 = vset.pattern.permute.xlu0 0
    %1071 = vperm.xlu0 %1070, %v1026
    %v1072 = vpop.permute.xlu0 %1071
    %1073 = vset.pattern.permute.xlu0 0
    %1074 = vperm.xlu0 %1073, %v1027
    %v1075 = vpop.permute.xlu0 %1074
    %1076 = vset.pattern.permute.xlu0 0
    %1077 = vperm.xlu0 %1076, %v1028
    %v1078 = vpop.permute.xlu0 %1077
    %1079 = vset.pattern.permute.xlu0 0
    %1080 = vperm.xlu0 %1079, %v1029
    %v1081 = vpop.permute.xlu0 %1080
    %1082 = vset.pattern.permute.xlu0 0
    %1083 = vperm.xlu0 %1082, %v1030
    %v1084 = vpop.permute.xlu0 %1083
    %1085 = vset.pattern.permute.xlu0 0
    %1086 = vperm.xlu0 %1085, %v1031
    %v1087 = vpop.permute.xlu0 %1086
    %1088 = vset.pattern.permute.xlu0 0
    %1089 = vperm.xlu0 %1088, %v1032
    %v1090 = vpop.permute.xlu0 %1089
    %1091 = vset.pattern.permute.xlu0 0
    %1092 = vperm.xlu0 %1091, %v1033
    %v1093 = vpop.permute.xlu0 %1092
    %1094 = vset.pattern.permute.xlu0 0
    %1095 = vperm.xlu0 %1094, %v1034
    %v1096 = vpop.permute.xlu0 %1095
    %1097 = vset.pattern.permute.xlu0 0
    %1098 = vperm.xlu0 %1097, %v1035
    %v1099 = vpop.permute.xlu0 %1098
    %v1100 = vlaneseq
    %v1101 = vshrl.u32 %v1100, 7
    %v1102 = vsub.s32 %v153, %v1101
    %v1103 = vrot.slane %v1054, %v1102
    %v1104 = vlaneseq
    %v1105 = vshrl.u32 %v1104, 7
    %v1106 = vsub.s32 %v153, %v1105
    %v1107 = vrot.slane %v1057, %v1106
    %v1108 = vlaneseq
    %v1109 = vshrl.u32 %v1108, 7
    %v1110 = vsub.s32 %v153, %v1109
    %v1111 = vrot.slane %v1060, %v1110
    %v1112 = vlaneseq
    %v1113 = vshrl.u32 %v1112, 7
    %v1114 = vsub.s32 %v153, %v1113
    %v1115 = vrot.slane %v1063, %v1114
    %v1116 = vlaneseq
    %v1117 = vshrl.u32 %v1116, 7
    %v1118 = vsub.s32 %v153, %v1117
    %v1119 = vrot.slane %v1066, %v1118
    %v1120 = vlaneseq
    %v1121 = vshrl.u32 %v1120, 7
    %v1122 = vsub.s32 %v153, %v1121
    %v1123 = vrot.slane %v1069, %v1122
    %v1124 = vlaneseq
    %v1125 = vshrl.u32 %v1124, 7
    %v1126 = vsub.s32 %v153, %v1125
    %v1127 = vrot.slane %v1072, %v1126
    %v1128 = vlaneseq
    %v1129 = vshrl.u32 %v1128, 7
    %v1130 = vsub.s32 %v153, %v1129
    %v1131 = vrot.slane %v1075, %v1130
    %v1132 = vlaneseq
    %v1133 = vshrl.u32 %v1132, 7
    %v1134 = vsub.s32 %v153, %v1133
    %v1135 = vrot.slane %v1078, %v1134
    %v1136 = vlaneseq
    %v1137 = vshrl.u32 %v1136, 7
    %v1138 = vsub.s32 %v153, %v1137
    %v1139 = vrot.slane %v1081, %v1138
    %v1140 = vlaneseq
    %v1141 = vshrl.u32 %v1140, 7
    %v1142 = vsub.s32 %v153, %v1141
    %v1143 = vrot.slane %v1084, %v1142
    %v1144 = vlaneseq
    %v1145 = vshrl.u32 %v1144, 7
    %v1146 = vsub.s32 %v153, %v1145
    %v1147 = vrot.slane %v1087, %v1146
    %v1148 = vlaneseq
    %v1149 = vshrl.u32 %v1148, 7
    %v1150 = vsub.s32 %v153, %v1149
    %v1151 = vrot.slane %v1090, %v1150
    %v1152 = vlaneseq
    %v1153 = vshrl.u32 %v1152, 7
    %v1154 = vsub.s32 %v153, %v1153
    %v1155 = vrot.slane %v1093, %v1154
    %v1156 = vlaneseq
    %v1157 = vshrl.u32 %v1156, 7
    %v1158 = vsub.s32 %v153, %v1157
    %v1159 = vrot.slane %v1096, %v1158
    %v1160 = vlaneseq
    %v1161 = vshrl.u32 %v1160, 7
    %v1162 = vsub.s32 %v153, %v1161
    %v1163 = vrot.slane %v1099, %v1162
    %v1164 = vsel %vm218, %v1107, %v1103
    %v1165 = vsel %vm218, %v1115, %v1111
    %v1166 = vsel %vm218, %v1123, %v1119
    %v1167 = vsel %vm218, %v1131, %v1127
    %v1168 = vsel %vm218, %v1139, %v1135
    %v1169 = vsel %vm218, %v1147, %v1143
    %v1170 = vsel %vm218, %v1155, %v1151
    %v1171 = vsel %vm218, %v1163, %v1159
    %v1180 = vsel %vm235, %v1164, 0.0
    %1181 = vadd.xlane.f32.xlu0 %v1180
    %v1182 = vpop.xlane.xlu0 %1181
    %v1183 = vsel %vm235, %v1165, 0.0
    %1184 = vadd.xlane.f32.xlu0 %v1183
    %v1185 = vpop.xlane.xlu0 %1184
    %v1186 = vsel %vm235, %v1166, 0.0
    %1187 = vadd.xlane.f32.xlu0 %v1186
    %v1188 = vpop.xlane.xlu0 %1187
    %v1189 = vsel %vm235, %v1167, 0.0
    %1190 = vadd.xlane.f32.xlu0 %v1189
    %v1191 = vpop.xlane.xlu0 %1190
    %v1192 = vsel %vm235, %v1168, 0.0
    %1193 = vadd.xlane.f32.xlu0 %v1192
    %v1194 = vpop.xlane.xlu0 %1193
    %v1195 = vsel %vm235, %v1169, 0.0
    %1196 = vadd.xlane.f32.xlu0 %v1195
    %v1197 = vpop.xlane.xlu0 %1196
    %v1198 = vsel %vm235, %v1170, 0.0
    %1199 = vadd.xlane.f32.xlu0 %v1198
    %v1200 = vpop.xlane.xlu0 %1199
    %v1201 = vsel %vm235, %v1171, 0.0
    %1202 = vadd.xlane.f32.xlu0 %v1201
    %v1203 = vpop.xlane.xlu0 %1202
    %v1204 = vmul.f32 %v1182, %v1182
    %v1205 = vmul.f32 %v1185, %v1185
    %v1206 = vmul.f32 %v1188, %v1188
    %v1207 = vmul.f32 %v1191, %v1191
    %v1208 = vmul.f32 %v1194, %v1194
    %v1209 = vmul.f32 %v1197, %v1197
    %v1210 = vmul.f32 %v1200, %v1200
    %v1211 = vmul.f32 %v1203, %v1203
    %v1212 = vand.u32 2147483647, %v1182
    %v1213 = vand.u32 2147483647, %v1185
    %v1214 = vand.u32 2147483647, %v1188
    %v1215 = vand.u32 2147483647, %v1191
    %v1216 = vand.u32 2147483647, %v1194
    %v1217 = vand.u32 2147483647, %v1197
    %v1218 = vand.u32 2147483647, %v1200
    %v1219 = vand.u32 2147483647, %v1203
    %v1220 = vmul.f32 %v1182, %v1212
    %v1221 = vmul.f32 %v1185, %v1213
    %v1222 = vmul.f32 %v1188, %v1214
    %v1223 = vmul.f32 %v1191, %v1215
    %v1224 = vmul.f32 %v1194, %v1216
    %v1225 = vmul.f32 %v1197, %v1217
    %v1226 = vmul.f32 %v1200, %v1218
    %v1227 = vmul.f32 %v1203, %v1219
    %v1228 = vadd.f32 %v1204, 1.0
    %v1229 = vadd.f32 %v1205, 1.0
    %v1230 = vadd.f32 %v1206, 1.0
    %v1231 = vadd.f32 %v1207, 1.0
    %v1232 = vadd.f32 %v1208, 1.0
    %v1233 = vadd.f32 %v1209, 1.0
    %v1234 = vadd.f32 %v1210, 1.0
    %v1235 = vadd.f32 %v1211, 1.0
    %v1236 = vrcp.pop %v1228
    %v1237 = vmul.f32 %v1220, %v1236
    %v1238 = vrcp.pop %v1229
    %v1239 = vmul.f32 %v1221, %v1238
    %v1240 = vrcp.pop %v1230
    %v1241 = vmul.f32 %v1222, %v1240
    %v1242 = vrcp.pop %v1231
    %v1243 = vmul.f32 %v1223, %v1242
    %v1244 = vrcp.pop %v1232
    %v1245 = vmul.f32 %v1224, %v1244
    %v1246 = vrcp.pop %v1233
    %v1247 = vmul.f32 %v1225, %v1246
    %v1248 = vrcp.pop %v1234
    %v1249 = vmul.f32 %v1226, %v1248
    %v1250 = vrcp.pop %v1235
    %v1251 = vmul.f32 %v1227, %v1250
    %v1260 = vlaneseq
    %v1261 = vshrl.u32 %v1260, 7
    %v1262 = vsub.s32 0, %v1261
    %v1263 = vrot.slane %v1237, %v1262
    %v1264 = vlaneseq
    %v1265 = vshrl.u32 %v1264, 7
    %v1266 = vsub.s32 1, %v1265
    %v1267 = vrot.slane %v1237, %v1266
    %v1268 = vlaneseq
    %v1269 = vshrl.u32 %v1268, 7
    %v1270 = vsub.s32 0, %v1269
    %v1271 = vrot.slane %v1239, %v1270
    %v1272 = vlaneseq
    %v1273 = vshrl.u32 %v1272, 7
    %v1274 = vsub.s32 1, %v1273
    %v1275 = vrot.slane %v1239, %v1274
    %v1276 = vlaneseq
    %v1277 = vshrl.u32 %v1276, 7
    %v1278 = vsub.s32 0, %v1277
    %v1279 = vrot.slane %v1241, %v1278
    %v1280 = vlaneseq
    %v1281 = vshrl.u32 %v1280, 7
    %v1282 = vsub.s32 1, %v1281
    %v1283 = vrot.slane %v1241, %v1282
    %v1284 = vlaneseq
    %v1285 = vshrl.u32 %v1284, 7
    %v1286 = vsub.s32 0, %v1285
    %v1287 = vrot.slane %v1243, %v1286
    %v1288 = vlaneseq
    %v1289 = vshrl.u32 %v1288, 7
    %v1290 = vsub.s32 1, %v1289
    %v1291 = vrot.slane %v1243, %v1290
    %v1292 = vlaneseq
    %v1293 = vshrl.u32 %v1292, 7
    %v1294 = vsub.s32 0, %v1293
    %v1295 = vrot.slane %v1245, %v1294
    %v1296 = vlaneseq
    %v1297 = vshrl.u32 %v1296, 7
    %v1298 = vsub.s32 1, %v1297
    %v1299 = vrot.slane %v1245, %v1298
    %v1300 = vlaneseq
    %v1301 = vshrl.u32 %v1300, 7
    %v1302 = vsub.s32 0, %v1301
    %v1303 = vrot.slane %v1247, %v1302
    %v1304 = vlaneseq
    %v1305 = vshrl.u32 %v1304, 7
    %v1306 = vsub.s32 1, %v1305
    %v1307 = vrot.slane %v1247, %v1306
    %v1308 = vlaneseq
    %v1309 = vshrl.u32 %v1308, 7
    %v1310 = vsub.s32 0, %v1309
    %v1311 = vrot.slane %v1249, %v1310
    %v1312 = vlaneseq
    %v1313 = vshrl.u32 %v1312, 7
    %v1314 = vsub.s32 1, %v1313
    %v1315 = vrot.slane %v1249, %v1314
    %v1316 = vlaneseq
    %v1317 = vshrl.u32 %v1316, 7
    %v1318 = vsub.s32 0, %v1317
    %v1319 = vrot.slane %v1251, %v1318
    %v1320 = vlaneseq
    %v1321 = vshrl.u32 %v1320, 7
    %v1322 = vsub.s32 1, %v1321
    %v1323 = vrot.slane %v1251, %v1322
    %v1340 = vmul.f32 %v68, %v1263
    %v1341 = vmul.f32 %v71, %v1267
    %v1342 = vmul.f32 %v74, %v1271
    %v1343 = vmul.f32 %v77, %v1275
    %v1344 = vmul.f32 %v80, %v1279
    %v1345 = vmul.f32 %v83, %v1283
    %v1346 = vmul.f32 %v86, %v1287
    %v1347 = vmul.f32 %v89, %v1291
    %v1348 = vmul.f32 %v92, %v1295
    %v1349 = vmul.f32 %v95, %v1299
    %v1350 = vmul.f32 %v98, %v1303
    %v1351 = vmul.f32 %v101, %v1307
    %v1352 = vmul.f32 %v104, %v1311
    %v1353 = vmul.f32 %v107, %v1315
    %v1354 = vmul.f32 %v110, %v1319
    %v1355 = vmul.f32 %v113, %v1323
    %v1356 = vadd.f32 %v412, %v1340
    %v1357 = vadd.f32 %v413, %v1341
    %v1358 = vadd.f32 %v414, %v1342
    %v1359 = vadd.f32 %v415, %v1343
    %v1360 = vadd.f32 %v416, %v1344
    %v1361 = vadd.f32 %v417, %v1345
    %v1362 = vadd.f32 %v418, %v1346
    %v1363 = vadd.f32 %v419, %v1347
    %v1364 = vadd.f32 %v420, %v1348
    %v1365 = vadd.f32 %v421, %v1349
    %v1366 = vadd.f32 %v422, %v1350
    %v1367 = vadd.f32 %v423, %v1351
    %v1368 = vadd.f32 %v424, %v1352
    %v1369 = vadd.f32 %v425, %v1353
    %v1370 = vadd.f32 %v426, %v1354
    %v1371 = vadd.f32 %v427, %v1355
    %1388 = vset.pattern.permute.xlu0 0
    %1389 = vperm.xlu0 %1388, %v1356
    %v1390 = vpop.permute.xlu0 %1389
    %1391 = vset.pattern.permute.xlu0 0
    %1392 = vperm.xlu0 %1391, %v1357
    %v1393 = vpop.permute.xlu0 %1392
    %1394 = vset.pattern.permute.xlu0 0
    %1395 = vperm.xlu0 %1394, %v1358
    %v1396 = vpop.permute.xlu0 %1395
    %1397 = vset.pattern.permute.xlu0 0
    %1398 = vperm.xlu0 %1397, %v1359
    %v1399 = vpop.permute.xlu0 %1398
    %1400 = vset.pattern.permute.xlu0 0
    %1401 = vperm.xlu0 %1400, %v1360
    %v1402 = vpop.permute.xlu0 %1401
    %1403 = vset.pattern.permute.xlu0 0
    %1404 = vperm.xlu0 %1403, %v1361
    %v1405 = vpop.permute.xlu0 %1404
    %1406 = vset.pattern.permute.xlu0 0
    %1407 = vperm.xlu0 %1406, %v1362
    %v1408 = vpop.permute.xlu0 %1407
    %1409 = vset.pattern.permute.xlu0 0
    %1410 = vperm.xlu0 %1409, %v1363
    %v1411 = vpop.permute.xlu0 %1410
    %1412 = vset.pattern.permute.xlu0 0
    %1413 = vperm.xlu0 %1412, %v1364
    %v1414 = vpop.permute.xlu0 %1413
    %1415 = vset.pattern.permute.xlu0 0
    %1416 = vperm.xlu0 %1415, %v1365
    %v1417 = vpop.permute.xlu0 %1416
    %1418 = vset.pattern.permute.xlu0 0
    %1419 = vperm.xlu0 %1418, %v1366
    %v1420 = vpop.permute.xlu0 %1419
    %1421 = vset.pattern.permute.xlu0 0
    %1422 = vperm.xlu0 %1421, %v1367
    %v1423 = vpop.permute.xlu0 %1422
    %1424 = vset.pattern.permute.xlu0 0
    %1425 = vperm.xlu0 %1424, %v1368
    %v1426 = vpop.permute.xlu0 %1425
    %1427 = vset.pattern.permute.xlu0 0
    %1428 = vperm.xlu0 %1427, %v1369
    %v1429 = vpop.permute.xlu0 %1428
    %1430 = vset.pattern.permute.xlu0 0
    %1431 = vperm.xlu0 %1430, %v1370
    %v1432 = vpop.permute.xlu0 %1431
    %1433 = vset.pattern.permute.xlu0 0
    %1434 = vperm.xlu0 %1433, %v1371
    %v1435 = vpop.permute.xlu0 %1434
    %v1436 = vlaneseq
    %v1437 = vshrl.u32 %v1436, 7
    %v1438 = vsub.s32 %v153, %v1437
    %v1439 = vrot.slane %v1390, %v1438
    %v1440 = vlaneseq
    %v1441 = vshrl.u32 %v1440, 7
    %v1442 = vsub.s32 %v153, %v1441
    %v1443 = vrot.slane %v1393, %v1442
    %v1444 = vlaneseq
    %v1445 = vshrl.u32 %v1444, 7
    %v1446 = vsub.s32 %v153, %v1445
    %v1447 = vrot.slane %v1396, %v1446
    %v1448 = vlaneseq
    %v1449 = vshrl.u32 %v1448, 7
    %v1450 = vsub.s32 %v153, %v1449
    %v1451 = vrot.slane %v1399, %v1450
    %v1452 = vlaneseq
    %v1453 = vshrl.u32 %v1452, 7
    %v1454 = vsub.s32 %v153, %v1453
    %v1455 = vrot.slane %v1402, %v1454
    %v1456 = vlaneseq
    %v1457 = vshrl.u32 %v1456, 7
    %v1458 = vsub.s32 %v153, %v1457
    %v1459 = vrot.slane %v1405, %v1458
    %v1460 = vlaneseq
    %v1461 = vshrl.u32 %v1460, 7
    %v1462 = vsub.s32 %v153, %v1461
    %v1463 = vrot.slane %v1408, %v1462
    %v1464 = vlaneseq
    %v1465 = vshrl.u32 %v1464, 7
    %v1466 = vsub.s32 %v153, %v1465
    %v1467 = vrot.slane %v1411, %v1466
    %v1468 = vlaneseq
    %v1469 = vshrl.u32 %v1468, 7
    %v1470 = vsub.s32 %v153, %v1469
    %v1471 = vrot.slane %v1414, %v1470
    %v1472 = vlaneseq
    %v1473 = vshrl.u32 %v1472, 7
    %v1474 = vsub.s32 %v153, %v1473
    %v1475 = vrot.slane %v1417, %v1474
    %v1476 = vlaneseq
    %v1477 = vshrl.u32 %v1476, 7
    %v1478 = vsub.s32 %v153, %v1477
    %v1479 = vrot.slane %v1420, %v1478
    %v1480 = vlaneseq
    %v1481 = vshrl.u32 %v1480, 7
    %v1482 = vsub.s32 %v153, %v1481
    %v1483 = vrot.slane %v1423, %v1482
    %v1484 = vlaneseq
    %v1485 = vshrl.u32 %v1484, 7
    %v1486 = vsub.s32 %v153, %v1485
    %v1487 = vrot.slane %v1426, %v1486
    %v1488 = vlaneseq
    %v1489 = vshrl.u32 %v1488, 7
    %v1490 = vsub.s32 %v153, %v1489
    %v1491 = vrot.slane %v1429, %v1490
    %v1492 = vlaneseq
    %v1493 = vshrl.u32 %v1492, 7
    %v1494 = vsub.s32 %v153, %v1493
    %v1495 = vrot.slane %v1432, %v1494
    %v1496 = vlaneseq
    %v1497 = vshrl.u32 %v1496, 7
    %v1498 = vsub.s32 %v153, %v1497
    %v1499 = vrot.slane %v1435, %v1498
    %v1500 = vsel %vm218, %v1443, %v1439
    %v1501 = vsel %vm218, %v1451, %v1447
    %v1502 = vsel %vm218, %v1459, %v1455
    %v1503 = vsel %vm218, %v1467, %v1463
    %v1504 = vsel %vm218, %v1475, %v1471
    %v1505 = vsel %vm218, %v1483, %v1479
    %v1506 = vsel %vm218, %v1491, %v1487
    %v1507 = vsel %vm218, %v1499, %v1495
    %v1516 = vsel %vm235, %v1500, -inf
    %1517 = vmax.xlane.f32.xlu0 %v1516
    %v1518 = vpop.xlane.xlu0 %1517
    %v1519 = vsel %vm235, %v1501, -inf
    %1520 = vmax.xlane.f32.xlu0 %v1519
    %v1521 = vpop.xlane.xlu0 %1520
    %v1522 = vsel %vm235, %v1502, -inf
    %1523 = vmax.xlane.f32.xlu0 %v1522
    %v1524 = vpop.xlane.xlu0 %1523
    %v1525 = vsel %vm235, %v1503, -inf
    %1526 = vmax.xlane.f32.xlu0 %v1525
    %v1527 = vpop.xlane.xlu0 %1526
    %v1528 = vsel %vm235, %v1504, -inf
    %1529 = vmax.xlane.f32.xlu0 %v1528
    %v1530 = vpop.xlane.xlu0 %1529
    %v1531 = vsel %vm235, %v1505, -inf
    %1532 = vmax.xlane.f32.xlu0 %v1531
    %v1533 = vpop.xlane.xlu0 %1532
    %v1534 = vsel %vm235, %v1506, -inf
    %1535 = vmax.xlane.f32.xlu0 %v1534
    %v1536 = vpop.xlane.xlu0 %1535
    %v1537 = vsel %vm235, %v1507, -inf
    %1538 = vmax.xlane.f32.xlu0 %v1537
    %v1539 = vpop.xlane.xlu0 %1538
    %v1548 = vlaneseq
    %v1549 = vshrl.u32 %v1548, 7
    %v1550 = vsub.s32 0, %v1549
    %v1551 = vrot.slane %v1518, %v1550
    %v1552 = vlaneseq
    %v1553 = vshrl.u32 %v1552, 7
    %v1554 = vsub.s32 1, %v1553
    %v1555 = vrot.slane %v1518, %v1554
    %v1556 = vlaneseq
    %v1557 = vshrl.u32 %v1556, 7
    %v1558 = vsub.s32 0, %v1557
    %v1559 = vrot.slane %v1521, %v1558
    %v1560 = vlaneseq
    %v1561 = vshrl.u32 %v1560, 7
    %v1562 = vsub.s32 1, %v1561
    %v1563 = vrot.slane %v1521, %v1562
    %v1564 = vlaneseq
    %v1565 = vshrl.u32 %v1564, 7
    %v1566 = vsub.s32 0, %v1565
    %v1567 = vrot.slane %v1524, %v1566
    %v1568 = vlaneseq
    %v1569 = vshrl.u32 %v1568, 7
    %v1570 = vsub.s32 1, %v1569
    %v1571 = vrot.slane %v1524, %v1570
    %v1572 = vlaneseq
    %v1573 = vshrl.u32 %v1572, 7
    %v1574 = vsub.s32 0, %v1573
    %v1575 = vrot.slane %v1527, %v1574
    %v1576 = vlaneseq
    %v1577 = vshrl.u32 %v1576, 7
    %v1578 = vsub.s32 1, %v1577
    %v1579 = vrot.slane %v1527, %v1578
    %v1580 = vlaneseq
    %v1581 = vshrl.u32 %v1580, 7
    %v1582 = vsub.s32 0, %v1581
    %v1583 = vrot.slane %v1530, %v1582
    %v1584 = vlaneseq
    %v1585 = vshrl.u32 %v1584, 7
    %v1586 = vsub.s32 1, %v1585
    %v1587 = vrot.slane %v1530, %v1586
    %v1588 = vlaneseq
    %v1589 = vshrl.u32 %v1588, 7
    %v1590 = vsub.s32 0, %v1589
    %v1591 = vrot.slane %v1533, %v1590
    %v1592 = vlaneseq
    %v1593 = vshrl.u32 %v1592, 7
    %v1594 = vsub.s32 1, %v1593
    %v1595 = vrot.slane %v1533, %v1594
    %v1596 = vlaneseq
    %v1597 = vshrl.u32 %v1596, 7
    %v1598 = vsub.s32 0, %v1597
    %v1599 = vrot.slane %v1536, %v1598
    %v1600 = vlaneseq
    %v1601 = vshrl.u32 %v1600, 7
    %v1602 = vsub.s32 1, %v1601
    %v1603 = vrot.slane %v1536, %v1602
    %v1604 = vlaneseq
    %v1605 = vshrl.u32 %v1604, 7
    %v1606 = vsub.s32 0, %v1605
    %v1607 = vrot.slane %v1539, %v1606
    %v1608 = vlaneseq
    %v1609 = vshrl.u32 %v1608, 7
    %v1610 = vsub.s32 1, %v1609
    %v1611 = vrot.slane %v1539, %v1610
    %v1628 = vsub.f32 %v1356, %v1551
    %v1629 = vsub.f32 %v1357, %v1555
    %v1630 = vsub.f32 %v1358, %v1559
    %v1631 = vsub.f32 %v1359, %v1563
    %v1632 = vsub.f32 %v1360, %v1567
    %v1633 = vsub.f32 %v1361, %v1571
    %v1634 = vsub.f32 %v1362, %v1575
    %v1635 = vsub.f32 %v1363, %v1579
    %v1636 = vsub.f32 %v1364, %v1583
    %v1637 = vsub.f32 %v1365, %v1587
    %v1638 = vsub.f32 %v1366, %v1591
    %v1639 = vsub.f32 %v1367, %v1595
    %v1640 = vsub.f32 %v1368, %v1599
    %v1641 = vsub.f32 %v1369, %v1603
    %v1642 = vsub.f32 %v1370, %v1607
    %v1643 = vsub.f32 %v1371, %v1611
    %v1644 = vmul.f32 %v1628, 1.442695
    %v1645 = vpow.pop %v1644
    %v1646 = vmul.f32 %v1629, 1.442695
    %v1647 = vpow.pop %v1646
    %v1648 = vmul.f32 %v1630, 1.442695
    %v1649 = vpow.pop %v1648
    %v1650 = vmul.f32 %v1631, 1.442695
    %v1651 = vpow.pop %v1650
    %v1652 = vmul.f32 %v1632, 1.442695
    %v1653 = vpow.pop %v1652
    %v1654 = vmul.f32 %v1633, 1.442695
    %v1655 = vpow.pop %v1654
    %v1656 = vmul.f32 %v1634, 1.442695
    %v1657 = vpow.pop %v1656
    %v1658 = vmul.f32 %v1635, 1.442695
    %v1659 = vpow.pop %v1658
    %v1660 = vmul.f32 %v1636, 1.442695
    %v1661 = vpow.pop %v1660
    %v1662 = vmul.f32 %v1637, 1.442695
    %v1663 = vpow.pop %v1662
    %v1664 = vmul.f32 %v1638, 1.442695
    %v1665 = vpow.pop %v1664
    %v1666 = vmul.f32 %v1639, 1.442695
    %v1667 = vpow.pop %v1666
    %v1668 = vmul.f32 %v1640, 1.442695
    %v1669 = vpow.pop %v1668
    %v1670 = vmul.f32 %v1641, 1.442695
    %v1671 = vpow.pop %v1670
    %v1672 = vmul.f32 %v1642, 1.442695
    %v1673 = vpow.pop %v1672
    %v1674 = vmul.f32 %v1643, 1.442695
    %v1675 = vpow.pop %v1674
    %1692 = vset.pattern.permute.xlu0 0
    %1693 = vperm.xlu0 %1692, %v1645
    %v1694 = vpop.permute.xlu0 %1693
    %1695 = vset.pattern.permute.xlu0 0
    %1696 = vperm.xlu0 %1695, %v1647
    %v1697 = vpop.permute.xlu0 %1696
    %1698 = vset.pattern.permute.xlu0 0
    %1699 = vperm.xlu0 %1698, %v1649
    %v1700 = vpop.permute.xlu0 %1699
    %1701 = vset.pattern.permute.xlu0 0
    %1702 = vperm.xlu0 %1701, %v1651
    %v1703 = vpop.permute.xlu0 %1702
    %1704 = vset.pattern.permute.xlu0 0
    %1705 = vperm.xlu0 %1704, %v1653
    %v1706 = vpop.permute.xlu0 %1705
    %1707 = vset.pattern.permute.xlu0 0
    %1708 = vperm.xlu0 %1707, %v1655
    %v1709 = vpop.permute.xlu0 %1708
    %1710 = vset.pattern.permute.xlu0 0
    %1711 = vperm.xlu0 %1710, %v1657
    %v1712 = vpop.permute.xlu0 %1711
    %1713 = vset.pattern.permute.xlu0 0
    %1714 = vperm.xlu0 %1713, %v1659
    %v1715 = vpop.permute.xlu0 %1714
    %1716 = vset.pattern.permute.xlu0 0
    %1717 = vperm.xlu0 %1716, %v1661
    %v1718 = vpop.permute.xlu0 %1717
    %1719 = vset.pattern.permute.xlu0 0
    %1720 = vperm.xlu0 %1719, %v1663
    %v1721 = vpop.permute.xlu0 %1720
    %1722 = vset.pattern.permute.xlu0 0
    %1723 = vperm.xlu0 %1722, %v1665
    %v1724 = vpop.permute.xlu0 %1723
    %1725 = vset.pattern.permute.xlu0 0
    %1726 = vperm.xlu0 %1725, %v1667
    %v1727 = vpop.permute.xlu0 %1726
    %1728 = vset.pattern.permute.xlu0 0
    %1729 = vperm.xlu0 %1728, %v1669
    %v1730 = vpop.permute.xlu0 %1729
    %1731 = vset.pattern.permute.xlu0 0
    %1732 = vperm.xlu0 %1731, %v1671
    %v1733 = vpop.permute.xlu0 %1732
    %1734 = vset.pattern.permute.xlu0 0
    %1735 = vperm.xlu0 %1734, %v1673
    %v1736 = vpop.permute.xlu0 %1735
    %1737 = vset.pattern.permute.xlu0 0
    %1738 = vperm.xlu0 %1737, %v1675
    %v1739 = vpop.permute.xlu0 %1738
    %v1740 = vlaneseq
    %v1741 = vshrl.u32 %v1740, 7
    %v1742 = vsub.s32 %v153, %v1741
    %v1743 = vrot.slane %v1694, %v1742
    %v1744 = vlaneseq
    %v1745 = vshrl.u32 %v1744, 7
    %v1746 = vsub.s32 %v153, %v1745
    %v1747 = vrot.slane %v1697, %v1746
    %v1748 = vlaneseq
    %v1749 = vshrl.u32 %v1748, 7
    %v1750 = vsub.s32 %v153, %v1749
    %v1751 = vrot.slane %v1700, %v1750
    %v1752 = vlaneseq
    %v1753 = vshrl.u32 %v1752, 7
    %v1754 = vsub.s32 %v153, %v1753
    %v1755 = vrot.slane %v1703, %v1754
    %v1756 = vlaneseq
    %v1757 = vshrl.u32 %v1756, 7
    %v1758 = vsub.s32 %v153, %v1757
    %v1759 = vrot.slane %v1706, %v1758
    %v1760 = vlaneseq
    %v1761 = vshrl.u32 %v1760, 7
    %v1762 = vsub.s32 %v153, %v1761
    %v1763 = vrot.slane %v1709, %v1762
    %v1764 = vlaneseq
    %v1765 = vshrl.u32 %v1764, 7
    %v1766 = vsub.s32 %v153, %v1765
    %v1767 = vrot.slane %v1712, %v1766
    %v1768 = vlaneseq
    %v1769 = vshrl.u32 %v1768, 7
    %v1770 = vsub.s32 %v153, %v1769
    %v1771 = vrot.slane %v1715, %v1770
    %v1772 = vlaneseq
    %v1773 = vshrl.u32 %v1772, 7
    %v1774 = vsub.s32 %v153, %v1773
    %v1775 = vrot.slane %v1718, %v1774
    %v1776 = vlaneseq
    %v1777 = vshrl.u32 %v1776, 7
    %v1778 = vsub.s32 %v153, %v1777
    %v1779 = vrot.slane %v1721, %v1778
    %v1780 = vlaneseq
    %v1781 = vshrl.u32 %v1780, 7
    %v1782 = vsub.s32 %v153, %v1781
    %v1783 = vrot.slane %v1724, %v1782
    %v1784 = vlaneseq
    %v1785 = vshrl.u32 %v1784, 7
    %v1786 = vsub.s32 %v153, %v1785
    %v1787 = vrot.slane %v1727, %v1786
    %v1788 = vlaneseq
    %v1789 = vshrl.u32 %v1788, 7
    %v1790 = vsub.s32 %v153, %v1789
    %v1791 = vrot.slane %v1730, %v1790
    %v1792 = vlaneseq
    %v1793 = vshrl.u32 %v1792, 7
    %v1794 = vsub.s32 %v153, %v1793
    %v1795 = vrot.slane %v1733, %v1794
    %v1796 = vlaneseq
    %v1797 = vshrl.u32 %v1796, 7
    %v1798 = vsub.s32 %v153, %v1797
    %v1799 = vrot.slane %v1736, %v1798
    %v1800 = vlaneseq
    %v1801 = vshrl.u32 %v1800, 7
    %v1802 = vsub.s32 %v153, %v1801
    %v1803 = vrot.slane %v1739, %v1802
    %v1804 = vsel %vm218, %v1747, %v1743
    %v1805 = vsel %vm218, %v1755, %v1751
    %v1806 = vsel %vm218, %v1763, %v1759
    %v1807 = vsel %vm218, %v1771, %v1767
    %v1808 = vsel %vm218, %v1779, %v1775
    %v1809 = vsel %vm218, %v1787, %v1783
    %v1810 = vsel %vm218, %v1795, %v1791
    %v1811 = vsel %vm218, %v1803, %v1799
    %v1820 = vsel %vm235, %v1804, 0.0
    %1821 = vadd.xlane.f32.xlu0 %v1820
    %v1822 = vpop.xlane.xlu0 %1821
    %v1823 = vsel %vm235, %v1805, 0.0
    %1824 = vadd.xlane.f32.xlu0 %v1823
    %v1825 = vpop.xlane.xlu0 %1824
    %v1826 = vsel %vm235, %v1806, 0.0
    %1827 = vadd.xlane.f32.xlu0 %v1826
    %v1828 = vpop.xlane.xlu0 %1827
    %v1829 = vsel %vm235, %v1807, 0.0
    %1830 = vadd.xlane.f32.xlu0 %v1829
    %v1831 = vpop.xlane.xlu0 %1830
    %v1832 = vsel %vm235, %v1808, 0.0
    %1833 = vadd.xlane.f32.xlu0 %v1832
    %v1834 = vpop.xlane.xlu0 %1833
    %v1835 = vsel %vm235, %v1809, 0.0
    %1836 = vadd.xlane.f32.xlu0 %v1835
    %v1837 = vpop.xlane.xlu0 %1836
    %v1838 = vsel %vm235, %v1810, 0.0
    %1839 = vadd.xlane.f32.xlu0 %v1838
    %v1840 = vpop.xlane.xlu0 %1839
    %v1841 = vsel %vm235, %v1811, 0.0
    %1842 = vadd.xlane.f32.xlu0 %v1841
    %v1843 = vpop.xlane.xlu0 %1842
    %v1852 = vlaneseq
    %v1853 = vshrl.u32 %v1852, 7
    %v1854 = vsub.s32 0, %v1853
    %v1855 = vrot.slane %v1822, %v1854
    %v1856 = vlaneseq
    %v1857 = vshrl.u32 %v1856, 7
    %v1858 = vsub.s32 1, %v1857
    %v1859 = vrot.slane %v1822, %v1858
    %v1860 = vlaneseq
    %v1861 = vshrl.u32 %v1860, 7
    %v1862 = vsub.s32 0, %v1861
    %v1863 = vrot.slane %v1825, %v1862
    %v1864 = vlaneseq
    %v1865 = vshrl.u32 %v1864, 7
    %v1866 = vsub.s32 1, %v1865
    %v1867 = vrot.slane %v1825, %v1866
    %v1868 = vlaneseq
    %v1869 = vshrl.u32 %v1868, 7
    %v1870 = vsub.s32 0, %v1869
    %v1871 = vrot.slane %v1828, %v1870
    %v1872 = vlaneseq
    %v1873 = vshrl.u32 %v1872, 7
    %v1874 = vsub.s32 1, %v1873
    %v1875 = vrot.slane %v1828, %v1874
    %v1876 = vlaneseq
    %v1877 = vshrl.u32 %v1876, 7
    %v1878 = vsub.s32 0, %v1877
    %v1879 = vrot.slane %v1831, %v1878
    %v1880 = vlaneseq
    %v1881 = vshrl.u32 %v1880, 7
    %v1882 = vsub.s32 1, %v1881
    %v1883 = vrot.slane %v1831, %v1882
    %v1884 = vlaneseq
    %v1885 = vshrl.u32 %v1884, 7
    %v1886 = vsub.s32 0, %v1885
    %v1887 = vrot.slane %v1834, %v1886
    %v1888 = vlaneseq
    %v1889 = vshrl.u32 %v1888, 7
    %v1890 = vsub.s32 1, %v1889
    %v1891 = vrot.slane %v1834, %v1890
    %v1892 = vlaneseq
    %v1893 = vshrl.u32 %v1892, 7
    %v1894 = vsub.s32 0, %v1893
    %v1895 = vrot.slane %v1837, %v1894
    %v1896 = vlaneseq
    %v1897 = vshrl.u32 %v1896, 7
    %v1898 = vsub.s32 1, %v1897
    %v1899 = vrot.slane %v1837, %v1898
    %v1900 = vlaneseq
    %v1901 = vshrl.u32 %v1900, 7
    %v1902 = vsub.s32 0, %v1901
    %v1903 = vrot.slane %v1840, %v1902
    %v1904 = vlaneseq
    %v1905 = vshrl.u32 %v1904, 7
    %v1906 = vsub.s32 1, %v1905
    %v1907 = vrot.slane %v1840, %v1906
    %v1908 = vlaneseq
    %v1909 = vshrl.u32 %v1908, 7
    %v1910 = vsub.s32 0, %v1909
    %v1911 = vrot.slane %v1843, %v1910
    %v1912 = vlaneseq
    %v1913 = vshrl.u32 %v1912, 7
    %v1914 = vsub.s32 1, %v1913
    %v1915 = vrot.slane %v1843, %v1914
    %v1932 = vrcp.pop %v1855
    %v1933 = vmul.f32 %v1645, %v1932
    %v1934 = vrcp.pop %v1859
    %v1935 = vmul.f32 %v1647, %v1934
    %v1936 = vrcp.pop %v1863
    %v1937 = vmul.f32 %v1649, %v1936
    %v1938 = vrcp.pop %v1867
    %v1939 = vmul.f32 %v1651, %v1938
    %v1940 = vrcp.pop %v1871
    %v1941 = vmul.f32 %v1653, %v1940
    %v1942 = vrcp.pop %v1875
    %v1943 = vmul.f32 %v1655, %v1942
    %v1944 = vrcp.pop %v1879
    %v1945 = vmul.f32 %v1657, %v1944
    %v1946 = vrcp.pop %v1883
    %v1947 = vmul.f32 %v1659, %v1946
    %v1948 = vrcp.pop %v1887
    %v1949 = vmul.f32 %v1661, %v1948
    %v1950 = vrcp.pop %v1891
    %v1951 = vmul.f32 %v1663, %v1950
    %v1952 = vrcp.pop %v1895
    %v1953 = vmul.f32 %v1665, %v1952
    %v1954 = vrcp.pop %v1899
    %v1955 = vmul.f32 %v1667, %v1954
    %v1956 = vrcp.pop %v1903
    %v1957 = vmul.f32 %v1669, %v1956
    %v1958 = vrcp.pop %v1907
    %v1959 = vmul.f32 %v1671, %v1958
    %v1960 = vrcp.pop %v1911
    %v1961 = vmul.f32 %v1673, %v1960
    %v1962 = vrcp.pop %v1915
    %v1963 = vmul.f32 %v1675, %v1962
    %v1964 = vmul.f32 %v1933, %v68
    %v1965 = vmul.f32 %v1935, %v71
    %v1966 = vmul.f32 %v1937, %v74
    %v1967 = vmul.f32 %v1939, %v77
    %v1968 = vmul.f32 %v1941, %v80
    %v1969 = vmul.f32 %v1943, %v83
    %v1970 = vmul.f32 %v1945, %v86
    %v1971 = vmul.f32 %v1947, %v89
    %v1972 = vmul.f32 %v1949, %v92
    %v1973 = vmul.f32 %v1951, %v95
    %v1974 = vmul.f32 %v1953, %v98
    %v1975 = vmul.f32 %v1955, %v101
    %v1976 = vmul.f32 %v1957, %v104
    %v1977 = vmul.f32 %v1959, %v107
    %v1978 = vmul.f32 %v1961, %v110
    %v1979 = vmul.f32 %v1963, %v113
    %1996 = vset.pattern.permute.xlu0 0
    %1997 = vperm.xlu0 %1996, %v1964
    %v1998 = vpop.permute.xlu0 %1997
    %1999 = vset.pattern.permute.xlu0 0
    %2000 = vperm.xlu0 %1999, %v1965
    %v2001 = vpop.permute.xlu0 %2000
    %2002 = vset.pattern.permute.xlu0 0
    %2003 = vperm.xlu0 %2002, %v1966
    %v2004 = vpop.permute.xlu0 %2003
    %2005 = vset.pattern.permute.xlu0 0
    %2006 = vperm.xlu0 %2005, %v1967
    %v2007 = vpop.permute.xlu0 %2006
    %2008 = vset.pattern.permute.xlu0 0
    %2009 = vperm.xlu0 %2008, %v1968
    %v2010 = vpop.permute.xlu0 %2009
    %2011 = vset.pattern.permute.xlu0 0
    %2012 = vperm.xlu0 %2011, %v1969
    %v2013 = vpop.permute.xlu0 %2012
    %2014 = vset.pattern.permute.xlu0 0
    %2015 = vperm.xlu0 %2014, %v1970
    %v2016 = vpop.permute.xlu0 %2015
    %2017 = vset.pattern.permute.xlu0 0
    %2018 = vperm.xlu0 %2017, %v1971
    %v2019 = vpop.permute.xlu0 %2018
    %2020 = vset.pattern.permute.xlu0 0
    %2021 = vperm.xlu0 %2020, %v1972
    %v2022 = vpop.permute.xlu0 %2021
    %2023 = vset.pattern.permute.xlu0 0
    %2024 = vperm.xlu0 %2023, %v1973
    %v2025 = vpop.permute.xlu0 %2024
    %2026 = vset.pattern.permute.xlu0 0
    %2027 = vperm.xlu0 %2026, %v1974
    %v2028 = vpop.permute.xlu0 %2027
    %2029 = vset.pattern.permute.xlu0 0
    %2030 = vperm.xlu0 %2029, %v1975
    %v2031 = vpop.permute.xlu0 %2030
    %2032 = vset.pattern.permute.xlu0 0
    %2033 = vperm.xlu0 %2032, %v1976
    %v2034 = vpop.permute.xlu0 %2033
    %2035 = vset.pattern.permute.xlu0 0
    %2036 = vperm.xlu0 %2035, %v1977
    %v2037 = vpop.permute.xlu0 %2036
    %2038 = vset.pattern.permute.xlu0 0
    %2039 = vperm.xlu0 %2038, %v1978
    %v2040 = vpop.permute.xlu0 %2039
    %2041 = vset.pattern.permute.xlu0 0
    %2042 = vperm.xlu0 %2041, %v1979
    %v2043 = vpop.permute.xlu0 %2042
    %v2044 = vlaneseq
    %v2045 = vshrl.u32 %v2044, 7
    %v2046 = vsub.s32 %v153, %v2045
    %v2047 = vrot.slane %v1998, %v2046
    %v2048 = vlaneseq
    %v2049 = vshrl.u32 %v2048, 7
    %v2050 = vsub.s32 %v153, %v2049
    %v2051 = vrot.slane %v2001, %v2050
    %v2052 = vlaneseq
    %v2053 = vshrl.u32 %v2052, 7
    %v2054 = vsub.s32 %v153, %v2053
    %v2055 = vrot.slane %v2004, %v2054
    %v2056 = vlaneseq
    %v2057 = vshrl.u32 %v2056, 7
    %v2058 = vsub.s32 %v153, %v2057
    %v2059 = vrot.slane %v2007, %v2058
    %v2060 = vlaneseq
    %v2061 = vshrl.u32 %v2060, 7
    %v2062 = vsub.s32 %v153, %v2061
    %v2063 = vrot.slane %v2010, %v2062
    %v2064 = vlaneseq
    %v2065 = vshrl.u32 %v2064, 7
    %v2066 = vsub.s32 %v153, %v2065
    %v2067 = vrot.slane %v2013, %v2066
    %v2068 = vlaneseq
    %v2069 = vshrl.u32 %v2068, 7
    %v2070 = vsub.s32 %v153, %v2069
    %v2071 = vrot.slane %v2016, %v2070
    %v2072 = vlaneseq
    %v2073 = vshrl.u32 %v2072, 7
    %v2074 = vsub.s32 %v153, %v2073
    %v2075 = vrot.slane %v2019, %v2074
    %v2076 = vlaneseq
    %v2077 = vshrl.u32 %v2076, 7
    %v2078 = vsub.s32 %v153, %v2077
    %v2079 = vrot.slane %v2022, %v2078
    %v2080 = vlaneseq
    %v2081 = vshrl.u32 %v2080, 7
    %v2082 = vsub.s32 %v153, %v2081
    %v2083 = vrot.slane %v2025, %v2082
    %v2084 = vlaneseq
    %v2085 = vshrl.u32 %v2084, 7
    %v2086 = vsub.s32 %v153, %v2085
    %v2087 = vrot.slane %v2028, %v2086
    %v2088 = vlaneseq
    %v2089 = vshrl.u32 %v2088, 7
    %v2090 = vsub.s32 %v153, %v2089
    %v2091 = vrot.slane %v2031, %v2090
    %v2092 = vlaneseq
    %v2093 = vshrl.u32 %v2092, 7
    %v2094 = vsub.s32 %v153, %v2093
    %v2095 = vrot.slane %v2034, %v2094
    %v2096 = vlaneseq
    %v2097 = vshrl.u32 %v2096, 7
    %v2098 = vsub.s32 %v153, %v2097
    %v2099 = vrot.slane %v2037, %v2098
    %v2100 = vlaneseq
    %v2101 = vshrl.u32 %v2100, 7
    %v2102 = vsub.s32 %v153, %v2101
    %v2103 = vrot.slane %v2040, %v2102
    %v2104 = vlaneseq
    %v2105 = vshrl.u32 %v2104, 7
    %v2106 = vsub.s32 %v153, %v2105
    %v2107 = vrot.slane %v2043, %v2106
    %v2108 = vsel %vm218, %v2051, %v2047
    %v2109 = vsel %vm218, %v2059, %v2055
    %v2110 = vsel %vm218, %v2067, %v2063
    %v2111 = vsel %vm218, %v2075, %v2071
    %v2112 = vsel %vm218, %v2083, %v2079
    %v2113 = vsel %vm218, %v2091, %v2087
    %v2114 = vsel %vm218, %v2099, %v2095
    %v2115 = vsel %vm218, %v2107, %v2103
    %v2124 = vsel %vm235, %v2108, 0.0
    %2125 = vadd.xlane.f32.xlu0 %v2124
    %v2126 = vpop.xlane.xlu0 %2125
    %v2127 = vsel %vm235, %v2109, 0.0
    %2128 = vadd.xlane.f32.xlu0 %v2127
    %v2129 = vpop.xlane.xlu0 %2128
    %v2130 = vsel %vm235, %v2110, 0.0
    %2131 = vadd.xlane.f32.xlu0 %v2130
    %v2132 = vpop.xlane.xlu0 %2131
    %v2133 = vsel %vm235, %v2111, 0.0
    %2134 = vadd.xlane.f32.xlu0 %v2133
    %v2135 = vpop.xlane.xlu0 %2134
    %v2136 = vsel %vm235, %v2112, 0.0
    %2137 = vadd.xlane.f32.xlu0 %v2136
    %v2138 = vpop.xlane.xlu0 %2137
    %v2139 = vsel %vm235, %v2113, 0.0
    %2140 = vadd.xlane.f32.xlu0 %v2139
    %v2141 = vpop.xlane.xlu0 %2140
    %v2142 = vsel %vm235, %v2114, 0.0
    %2143 = vadd.xlane.f32.xlu0 %v2142
    %v2144 = vpop.xlane.xlu0 %2143
    %v2145 = vsel %vm235, %v2115, 0.0
    %2146 = vadd.xlane.f32.xlu0 %v2145
    %v2147 = vpop.xlane.xlu0 %2146
    %v2148 = vmul.f32 %v2126, %v2126
    %v2149 = vmul.f32 %v2129, %v2129
    %v2150 = vmul.f32 %v2132, %v2132
    %v2151 = vmul.f32 %v2135, %v2135
    %v2152 = vmul.f32 %v2138, %v2138
    %v2153 = vmul.f32 %v2141, %v2141
    %v2154 = vmul.f32 %v2144, %v2144
    %v2155 = vmul.f32 %v2147, %v2147
    %v2156 = vand.u32 2147483647, %v2126
    %v2157 = vand.u32 2147483647, %v2129
    %v2158 = vand.u32 2147483647, %v2132
    %v2159 = vand.u32 2147483647, %v2135
    %v2160 = vand.u32 2147483647, %v2138
    %v2161 = vand.u32 2147483647, %v2141
    %v2162 = vand.u32 2147483647, %v2144
    %v2163 = vand.u32 2147483647, %v2147
    %v2164 = vmul.f32 %v2126, %v2156
    %v2165 = vmul.f32 %v2129, %v2157
    %v2166 = vmul.f32 %v2132, %v2158
    %v2167 = vmul.f32 %v2135, %v2159
    %v2168 = vmul.f32 %v2138, %v2160
    %v2169 = vmul.f32 %v2141, %v2161
    %v2170 = vmul.f32 %v2144, %v2162
    %v2171 = vmul.f32 %v2147, %v2163
    %v2172 = vadd.f32 %v2148, 1.0
    %v2173 = vadd.f32 %v2149, 1.0
    %v2174 = vadd.f32 %v2150, 1.0
    %v2175 = vadd.f32 %v2151, 1.0
    %v2176 = vadd.f32 %v2152, 1.0
    %v2177 = vadd.f32 %v2153, 1.0
    %v2178 = vadd.f32 %v2154, 1.0
    %v2179 = vadd.f32 %v2155, 1.0
    %v2180 = vrcp.pop %v2172
    %v2181 = vmul.f32 %v2164, %v2180
    %v2182 = vrcp.pop %v2173
    %v2183 = vmul.f32 %v2165, %v2182
    %v2184 = vrcp.pop %v2174
    %v2185 = vmul.f32 %v2166, %v2184
    %v2186 = vrcp.pop %v2175
    %v2187 = vmul.f32 %v2167, %v2186
    %v2188 = vrcp.pop %v2176
    %v2189 = vmul.f32 %v2168, %v2188
    %v2190 = vrcp.pop %v2177
    %v2191 = vmul.f32 %v2169, %v2190
    %v2192 = vrcp.pop %v2178
    %v2193 = vmul.f32 %v2170, %v2192
    %v2194 = vrcp.pop %v2179
    %v2195 = vmul.f32 %v2171, %v2194
    %v2204 = vlaneseq
    %v2205 = vshrl.u32 %v2204, 7
    %v2206 = vsub.s32 %v153, %v2205
    %v2207 = vrot.slane %v2181, %v2206
    %v2208 = vlaneseq
    %v2209 = vshrl.u32 %v2208, 7
    %v2210 = vsub.s32 %v153, %v2209
    %v2211 = vrot.slane %v2183, %v2210
    %v2212 = vlaneseq
    %v2213 = vshrl.u32 %v2212, 7
    %v2214 = vsub.s32 %v153, %v2213
    %v2215 = vrot.slane %v2185, %v2214
    %v2216 = vlaneseq
    %v2217 = vshrl.u32 %v2216, 7
    %v2218 = vsub.s32 %v153, %v2217
    %v2219 = vrot.slane %v2187, %v2218
    %v2220 = vlaneseq
    %v2221 = vshrl.u32 %v2220, 7
    %v2222 = vsub.s32 %v153, %v2221
    %v2223 = vrot.slane %v2189, %v2222
    %v2224 = vlaneseq
    %v2225 = vshrl.u32 %v2224, 7
    %v2226 = vsub.s32 %v153, %v2225
    %v2227 = vrot.slane %v2191, %v2226
    %v2228 = vlaneseq
    %v2229 = vshrl.u32 %v2228, 7
    %v2230 = vsub.s32 %v153, %v2229
    %v2231 = vrot.slane %v2193, %v2230
    %v2232 = vlaneseq
    %v2233 = vshrl.u32 %v2232, 7
    %v2234 = vsub.s32 %v153, %v2233
    %v2235 = vrot.slane %v2195, %v2234
    %v2236 = vsel %vm218, %v2211, %v2207
    %vm2237 = vcmask 1042434
    %v2238 = vsel %vm2237, %v2215, %v2236
    %vm2239 = vcmask 1043459
    %v2240 = vsel %vm2239, %v2219, %v2238
    %vm2241 = vcmask 1044484
    %v2242 = vsel %vm2241, %v2223, %v2240
    %vm2243 = vcmask 1045509
    %v2244 = vsel %vm2243, %v2227, %v2242
    %vm2245 = vcmask 1046534
    %v2246 = vsel %vm2245, %v2231, %v2244
    %vm2247 = vcmask 1047559
    %v2248 = vsel %vm2247, %v2235, %v2246
    %vm2250 = vcmask 15360
    %2251 = vst.msk [vmem:[%s2] sm:$0xff] %vm2250, %v2248
    // Predicated region
    $region18: #{tpu_custom_call.1} parent=1 // pred_check
      _
    $region19: #{tpu_custom_call.1} parent=1 // pred_check_branch
      %2253 = sbr.rel (0) target = $region21
    $region20: #{tpu_custom_call.1} parent=1 // pred_region
      _
    $region21: #{tpu_custom_call.1} parent=1 // pred_fallthru
      _
    // Predicated region
    $region22: #{tpu_custom_call.1} parent=1 // pred_check
      _
    $region23: #{tpu_custom_call.1} parent=1 // pred_check_branch
      %2255 = sbr.rel (0) target = $region25
    $region24: #{tpu_custom_call.1} parent=1 // pred_region
      _
    $region25: #{tpu_custom_call.1} parent=1 // pred_fallthru
      _
    %2256 = vsyncpa [#allocation3], 1
    %2257 = vsyncpa [#allocation5], 1

</llo_original>
